<compile_context>
chip_gen: v5e
topology: v5e:2x2
jax: 0.10.0
libtpu: 0.0.40
codegen_flags: <defaults>
</compile_context>

<pallas_src>
import functools

import jax
import jax.numpy as jnp
from jax import lax
from jax.experimental import pallas as pl
from jax.experimental.pallas import tpu as pltpu


def _sigmoid(x):
    # explicit form (exp + add + div) — lowers cleanly on all TPU generations
    return 1.0 / (1.0 + jnp.exp(-x))


# ----------------------------------------------------------------------------
# Fused kernel: src BiLSTM + tgt BiLSTM + MLP head
# ----------------------------------------------------------------------------
def fused_binary_model_kernel(
    # inputs
    x_ref,      # (T_max*Bp, 2Ds+2Dt) fused time-major inputs [src_f|src_b|tgt_f|tgt_b]
    pos_ref,    # (Bp, H)              position embeddings
    wih_ref,    # (2Ds+2Dt, 16H)       fused input->gate weights (bwd pre-time-reversed)
    b_ref,      # (1, 16H)             fused gate bias (b_ih + b_hh, all rnn/dirs)
    wrec_ref,   # (4H, 16H)            block-diag recurrent weights
    w1h_ref,    # (4H, H)              MLP layer-1 weights acting on the RNN state
    w1p_ref,    # (H, H)               MLP layer-1 weights acting on pos embeddings
    b1_ref,     # (1, H)
    w2_ref,     # (H, 128)             w2 tiled across 128 lanes (lane-dense output)
    b2_ref,     # (1, 128)
    # outputs
    o_ref,      # (Bp, 128)            logit replicated across lanes; col 0 is real
    # scratch
    xp_ref,     # VMEM (T_max*Bp, 16H) hoisted input projection
    *, T_src, T_tgt, Bp, H,
):
    T_common = min(T_src, T_tgt)
    T_max = max(T_src, T_tgt)

    # ---- hoisted input projection: one wide MXU matmul, fwd/bwd pre-time-aligned ----
    xp_ref[...] = (
        jnp.dot(x_ref[...], wih_ref[...], preferred_element_type=jnp.float32)
        + b_ref[...]
    )

    # Keep W_rec staged across the whole recurrence (loaded once, reused every step).
    wrec = wrec_ref[...]

    def lstm_step(t, h, c, update_mask=None):
        start = pl.multiple_of(t * Bp, Bp)
        # One block-diag matmul drives src_fwd/src_bwd/tgt_fwd/tgt_bwd simultaneously,
        # plus a single contiguous dynamic xp read for this step.
        gates = (
            jnp.dot(h, wrec, preferred_element_type=jnp.float32)
            + xp_ref[pl.ds(start, Bp), :]
        )  # (Bp, 16H), layout [i | f | g | o], each 4H wide (full vreg)
        i = _sigmoid(gates[:, 0:4 * H])
        f = _sigmoid(gates[:, 4 * H:8 * H])
        g = jnp.tanh(gates[:, 8 * H:12 * H])
        o = _sigmoid(gates[:, 12 * H:16 * H])
        c_new = f * c + i * g
        h_new = o * jnp.tanh(c_new)
        if update_mask is not None:
            c_new = jnp.where(update_mask, c_new, c)
            h_new = jnp.where(update_mask, h_new, h)
        return h_new, c_new

    h0 = jnp.zeros((Bp, 4 * H), jnp.float32)
    c0 = jnp.zeros((Bp, 4 * H), jnp.float32)

    def fused_body(t, carry):
        h, c = carry
        return lstm_step(t, h, c)

    h, c = lax.fori_loop(0, T_common, fused_body, (h0, c0), unroll=True)

    # Tail: if one sequence is longer, keep stepping only its half of the state.
    if T_max > T_common:
        lane = lax.broadcasted_iota(jnp.int32, (1, 4 * H), 1)
        keep = (lane < 2 * H) if (T_src > T_tgt) else (lane >= 2 * H)
        keep = jnp.broadcast_to(keep, (Bp, 4 * H))

        def tail_body(t, carry):
            hh, cc = carry
            return lstm_step(t, hh, cc, update_mask=keep)

        h, c = lax.fori_loop(T_common, T_max, tail_body, (h, c), unroll=True)

    # feats = [src_fwd | src_bwd | tgt_fwd | tgt_bwd | pos]; src rows are already
    # replicated across the batch.  w1 is split so no lane-concat is needed.
    h1 = (
        jnp.dot(h, w1h_ref[...], preferred_element_type=jnp.float32)
        + jnp.dot(pos_ref[...], w1p_ref[...], preferred_element_type=jnp.float32)
        + b1_ref[...]
    )
    h1 = jnp.maximum(h1, 0.0)
    out = jnp.dot(h1, w2_ref[...], preferred_element_type=jnp.float32) + b2_ref[...]
    o_ref[...] = out.astype(o_ref.dtype)


# ----------------------------------------------------------------------------
# Parameter construction (deterministic, synthetic)
# ----------------------------------------------------------------------------
def make_lstm_dir_params(key, input_dim, hidden_dim):
    ks = jax.random.split(key, 3)
    scale = 0.1
    return {
        "wih": scale * jax.random.normal(ks[0], (input_dim, 4 * hidden_dim), jnp.float32),
        "whh": scale * jax.random.normal(ks[1], (hidden_dim, 4 * hidden_dim), jnp.float32),
        # b = b_ih + b_hh packed into a single (1, 4H) row (PyTorch sums them anyway)
        "b": scale * jax.random.normal(ks[2], (1, 4 * hidden_dim), jnp.float32),
    }


def make_params(key, src_word_num, src_word_dim, tgt_word_num, tgt_word_dim, hidden_dim):
    ks = jax.random.split(key, 10)
    scale = 0.1

    src_embed = scale * jax.random.normal(ks[0], (src_word_num, src_word_dim), jnp.float32)
    src_embed = src_embed.at[0].set(0.0)  # padding_idx=0
    tgt_embed = scale * jax.random.normal(ks[1], (tgt_word_num, tgt_word_dim), jnp.float32)
    tgt_embed = tgt_embed.at[0].set(0.0)  # padding_idx=0
    pos_embed = scale * jax.random.normal(ks[2], (500, tgt_word_dim), jnp.float32)

    src_f = make_lstm_dir_params(ks[3], src_word_dim, hidden_dim)
    src_b = make_lstm_dir_params(ks[4], src_word_dim, hidden_dim)
    tgt_f = make_lstm_dir_params(ks[5], tgt_word_dim, hidden_dim)
    tgt_b = make_lstm_dir_params(ks[6], tgt_word_dim, hidden_dim)

    w1 = scale * jax.random.normal(ks[7], (5 * hidden_dim, hidden_dim), jnp.float32)
    b1 = scale * jax.random.normal(ks[8], (1, hidden_dim), jnp.float32)
    w2 = scale * jax.random.normal(ks[9], (hidden_dim, 1), jnp.float32)
    b2 = jnp.zeros((1, 1), jnp.float32)

    return {
        "src_embed": src_embed,
        "tgt_embed": tgt_embed,
        "pos_embed": pos_embed,
        "src_rnn": {
            "wih_f": src_f["wih"], "whh_f": src_f["whh"], "b_f": src_f["b"],
            "wih_b": src_b["wih"], "whh_b": src_b["whh"], "b_b": src_b["b"],
        },
        "tgt_rnn": {
            "wih_f": tgt_f["wih"], "whh_f": tgt_f["whh"], "b_f": tgt_f["b"],
            "wih_b": tgt_b["wih"], "whh_b": tgt_b["whh"], "b_b": tgt_b["b"],
        },
        "mlp": {"w1": w1, "b1": b1, "w2": w2, "b2": b2},
    }


# ----------------------------------------------------------------------------
# Weight packing: fused gate layout
#   gate columns: for gate g in [i, f, g, o] (index 0..3):
#     cols [g*4H + 0H : +H)  src fwd
#     cols [g*4H + 1H : +H)  src bwd
#     cols [g*4H + 2H : +H)  tgt fwd
#     cols [g*4H + 3H : +H)  tgt bwd
#   state columns:  [src_fwd | src_bwd | tgt_fwd | tgt_bwd]  (4H total)
#   input columns:  [src_fwd(t) | src_bwd(T-1-t) | tgt_fwd(t) | tgt_bwd(T-1-t)]
# ----------------------------------------------------------------------------
def pack_fused_weights(params, H, D_src, D_tgt):
    src, tgt = params["src_rnn"], params["tgt_rnn"]
    D_in = 2 * D_src + 2 * D_tgt
    wih = jnp.zeros((D_in, 16 * H), jnp.float32)
    bias = jnp.zeros((1, 16 * H), jnp.float32)
    wrec = jnp.zeros((4 * H, 16 * H), jnp.float32)

    def place(wih, bias, wrec, w_ih, w_hh, b, row_ih, row_hh, col):
        for g in range(4):
            cs = g * 4 * H + col
            wih = wih.at[row_ih:row_ih + w_ih.shape[0], cs:cs + H].set(w_ih[:, g * H:(g + 1) * H])
            wrec = wrec.at[row_hh:row_hh + H, cs:cs + H].set(w_hh[:, g * H:(g + 1) * H])
            bias = bias.at[:, cs:cs + H].set(b[:, g * H:(g + 1) * H])
        return wih, bias, wrec

    wih, bias, wrec = place(wih, bias, wrec, src["wih_f"], src["whh_f"], src["b_f"], 0, 0, 0)
    wih, bias, wrec = place(wih, bias, wrec, src["wih_b"], src["whh_b"], src["b_b"], D_src, H, H)
    wih, bias, wrec = place(wih, bias, wrec, tgt["wih_f"], tgt["whh_f"], tgt["b_f"], 2 * D_src, 2 * H, 2 * H)
    wih, bias, wrec = place(wih, bias, wrec, tgt["wih_b"], tgt["whh_b"], tgt["b_b"], 2 * D_src + D_tgt, 3 * H, 3 * H)
    return wih, bias, wrec


# ----------------------------------------------------------------------------
# Forward pass (mirrors BinaryModel.forward); single fused pallas_call
# ----------------------------------------------------------------------------
@jax.jit
def binary_model_forward(params, src_tokens, tgt_tokens):
    """src_tokens: (1, S_src) int32; tgt_tokens: (B, S_tgt) int32 -> (B,) f32."""
    B = tgt_tokens.shape[0]
    H = params["mlp"]["w2"].shape[0]            # hidden_dim
    D_src = params["src_embed"].shape[1]
    D_tgt = params["tgt_embed"].shape[1]
    # The module's Linear(5H -> H) implies tgt_word_dim == hidden_dim.
    assert D_tgt == H, f"tgt_word_dim ({D_tgt}) must equal hidden_dim ({H})"
    assert B <= 500, "pos_embed only has 500 rows"

    Bp = max(8, ((B + 7) // 8) * 8)             # pad batch to full sublanes

    pos = jnp.arange(B, dtype=tgt_tokens.dtype)

    # --- embedding gathers (plain JAX glue) ---
    src_emb = params["src_embed"][src_tokens][0]            # (T_src, D_src)
    tgt_emb = params["tgt_embed"][tgt_tokens]               # (B, T_tgt, D_tgt)
    pos_h = params["pos_embed"][pos]                        # (B, H)

    T_src, T_tgt = src_emb.shape[0], tgt_emb.shape[1]
    T_max = max(T_src, T_tgt)
    D_in = 2 * D_src + 2 * D_tgt

    tgt_emb_p = jnp.pad(tgt_emb, ((0, Bp - B), (0, 0), (0, 0)))   # (Bp, T_tgt, D)
    pos_p = jnp.pad(pos_h, ((0, Bp - B), (0, 0)))                 # (Bp, H)

    # --- fused, pre-time-reversed, time-major input: row (t, b) =
    #     [src_emb[t] | src_emb[Ts-1-t] | tgt_emb[b, t] | tgt_emb[b, Tt-1-t]] ---
    t_idx = jnp.arange(T_max)
    sf = jnp.clip(t_idx, 0, T_src - 1)
    sb = jnp.clip((T_src - 1) - t_idx, 0, T_src - 1)
    tf = jnp.clip(t_idx, 0, T_tgt - 1)
    tb = jnp.clip((T_tgt - 1) - t_idx, 0, T_tgt - 1)

    src_fb = jnp.concatenate([src_emb[sf], src_emb[sb]], axis=-1)            # (T_max, 2Ds)
    src_fb = jnp.broadcast_to(src_fb[:, None, :], (T_max, Bp, 2 * D_src))
    tgt_fb = jnp.concatenate([tgt_emb_p[:, tf, :], tgt_emb_p[:, tb, :]], axis=-1)
    tgt_fb = jnp.transpose(tgt_fb, (1, 0, 2))                                # (T_max, Bp, 2Dt)
    x_fused = jnp.concatenate([src_fb, tgt_fb], axis=-1).reshape(T_max * Bp, D_in)

    # --- packed weights ---
    wih, bias, wrec = pack_fused_weights(params, H, D_src, D_tgt)

    m = params["mlp"]
    w1h = m["w1"][0:4 * H, :]                   # acts on [src_f|src_b|tgt_f|tgt_b]
    w1p = m["w1"][4 * H:5 * H, :]               # acts on pos embeddings
    w2p = jnp.tile(m["w2"], (1, 128))           # lane-dense final output
    b2p = jnp.tile(m["b2"], (1, 128))

    kernel = functools.partial(
        fused_binary_model_kernel, T_src=T_src, T_tgt=T_tgt, Bp=Bp, H=H
    )

    kernel_inputs = (x_fused, pos_p, wih, bias, wrec, w1h, w1p, m["b1"], w2p, b2p)

    # VMEM budget derived from shapes (inputs + xp scratch + output) with 2x headroom;
    # capped below v7x's 64 MiB physical VMEM.  TODO(synk): if T*Bp*16H scales toward
    # that cap, chunk the time axis (emit_pipeline over HBM-resident xp).
    in_bytes = sum(a.size * a.dtype.itemsize for a in kernel_inputs)
    scratch_bytes = T_max * Bp * 16 * H * 4
    out_bytes = Bp * 128 * 4
    vmem_limit = int(min(64 * 2**20,
                         max(16 * 2**20, 2 * (in_bytes + scratch_bytes + out_bytes) + (1 << 20))))

    vmem = pltpu.MemorySpace.VMEM
    out_pad = pl.pallas_call(
        kernel,
        out_shape=jax.ShapeDtypeStruct((Bp, 128), jnp.float32),
        in_specs=[pl.BlockSpec(memory_space=vmem) for _ in range(len(kernel_inputs))],
        out_specs=pl.BlockSpec(memory_space=vmem),
        scratch_shapes=[
            pltpu.VMEM((T_max * Bp, 16 * H), jnp.float32),   # hoisted input projection
        ],
        compiler_params=pltpu.CompilerParams(vmem_limit_bytes=vmem_limit),
    )(*kernel_inputs)

    # dropout -> identity (inference mode); column 0 holds the logit
    return out_pad[:B, 0]


if __name__ == "__main__":
    # Small shapes consistent with the module (tgt_word_dim == hidden_dim so that the
    # concatenated feature width is 5 * hidden_dim).
    src_word_num, src_word_dim = 50, 32
    tgt_word_num, tgt_word_dim = 60, 32
    hidden_dim = 32
    batch_size = 2        # number of target candidates (also the pos indices)
    src_len, tgt_len = 8, 8

    key = jax.random.PRNGKey(0)
    pkey, skey, tkey = jax.random.split(key, 3)

    params = make_params(pkey, src_word_num, src_word_dim,
                         tgt_word_num, tgt_word_dim, hidden_dim)

    src_tokens = jax.random.randint(skey, (1, src_len), 0, src_word_num, dtype=jnp.int32)
    tgt_tokens = jax.random.randint(tkey, (batch_size, tgt_len), 0, tgt_word_num, dtype=jnp.int32)

    out = binary_model_forward(params, src_tokens, tgt_tokens)
    out = jax.block_until_ready(out)

    assert out.shape == (batch_size,), out.shape
    assert out.dtype == jnp.float32, out.dtype
    assert bool(jnp.all(jnp.isfinite(out)))
    print("KERNEL_OK")
</pallas_src>

<mosaic_0001>
module attributes {stable_mosaic.version = 11 : i64} {
  func.func @fused_binary_model_kernel(%arg0: memref<64x128xf32, #tpu.memory_space<vmem>>, %arg1: memref<8x32xf32, #tpu.memory_space<vmem>>, %arg2: memref<128x512xf32, #tpu.memory_space<vmem>>, %arg3: memref<1x512xf32, #tpu.memory_space<vmem>>, %arg4: memref<128x512xf32, #tpu.memory_space<vmem>>, %arg5: memref<128x32xf32, #tpu.memory_space<vmem>>, %arg6: memref<32x32xf32, #tpu.memory_space<vmem>>, %arg7: memref<1x32xf32, #tpu.memory_space<vmem>>, %arg8: memref<32x128xf32, #tpu.memory_space<vmem>>, %arg9: memref<1x128xf32, #tpu.memory_space<vmem>>, %arg10: memref<8x128xf32, #tpu.memory_space<vmem>>, %arg11: memref<64x512xf32, #tpu.memory_space<vmem>>) attributes {dimension_semantics = [], scalar_prefetch = 0 : i64, scratch_operands = 1 : i64, tpu.core_type = #tpu.core_type<tc>} {
    %c0 = arith.constant 0 : index
    %c0_0 = arith.constant 0 : index
    %0 = vector.load %arg0[%c0, %c0_0] : memref<64x128xf32, #tpu.memory_space<vmem>>, vector<64x128xf32>
    %c0_1 = arith.constant 0 : index
    %c0_2 = arith.constant 0 : index
    %1 = vector.load %arg2[%c0_1, %c0_2] : memref<128x512xf32, #tpu.memory_space<vmem>>, vector<128x512xf32>
    %cst = arith.constant dense<0.000000e+00> : vector<64x512xf32>
    %2 = tpu.matmul %0, %1, %cst {dimension_numbers = #tpu.dot_dimension_numbers<[1], [0], [0], [1], [0, 0, 1, 1], [], []>} : vector<64x128xf32>, vector<128x512xf32>, vector<64x512xf32> -> vector<64x512xf32>
    %c0_3 = arith.constant 0 : index
    %c0_4 = arith.constant 0 : index
    %3 = vector.load %arg3[%c0_3, %c0_4] : memref<1x512xf32, #tpu.memory_space<vmem>>, vector<1x512xf32>
    %4 = vector.broadcast %3 : vector<1x512xf32> to vector<64x512xf32>
    %5 = arith.addf %2, %4 : vector<64x512xf32>
    %c0_5 = arith.constant 0 : index
    %c0_6 = arith.constant 0 : index
    %6 = vector.load %arg11[%c0_5, %c0_6] : memref<64x512xf32, #tpu.memory_space<vmem>>, vector<64x512xf32>
    tpu.vector_store %arg11[%c0_5, %c0_6], %5 {strides = array<i32>} : memref<64x512xf32, #tpu.memory_space<vmem>>, vector<64x512xf32>,
    %c0_7 = arith.constant 0 : index
    %c0_8 = arith.constant 0 : index
    %7 = vector.load %arg4[%c0_7, %c0_8] : memref<128x512xf32, #tpu.memory_space<vmem>>, vector<128x512xf32>
    %cst_9 = arith.constant 0.000000e+00 : f32
    %8 = vector.broadcast %cst_9 : f32 to vector<8x128xf32>
    %cst_10 = arith.constant 0.000000e+00 : f32
    %9 = vector.broadcast %cst_10 : f32 to vector<8x128xf32>
    %c0_i32 = arith.constant 0 : i32
    %c8_i32 = arith.constant 8 : i32
    %10 = arith.muli %c0_i32, %c8_i32 : i32
    %11 = tpu.assume_multiple %10, 8 : i32
    %cst_11 = arith.constant dense<0.000000e+00> : vector<8x512xf32>
    %12 = tpu.matmul %8, %7, %cst_11 {dimension_numbers = #tpu.dot_dimension_numbers<[1], [0], [0], [1], [0, 0, 1, 1], [], []>} : vector<8x128xf32>, vector<128x512xf32>, vector<8x512xf32> -> vector<8x512xf32>
    %13 = arith.index_cast %11 : i32 to index
    %c0_12 = arith.constant 0 : index
    %14 = vector.load %arg11[%13, %c0_12] : memref<64x512xf32, #tpu.memory_space<vmem>>, vector<8x512xf32>
    %15 = arith.addf %12, %14 : vector<8x512xf32>
    %16 = vector.extract_strided_slice %15 {offsets = [0, 0], sizes = [8, 128], strides = [1, 1]} : vector<8x512xf32> to vector<8x128xf32>
    %cst_13 = arith.constant 0.000000e+00 : f32
    %17 = vector.broadcast %cst_13 : f32 to vector<8x128xf32>
    %18 = arith.subf %17, %16 : vector<8x128xf32>
    %19 = math.exp %18 : vector<8x128xf32>
    %cst_14 = arith.constant 1.000000e+00 : f32
    %20 = vector.broadcast %cst_14 : f32 to vector<8x128xf32>
    %21 = arith.addf %20, %19 : vector<8x128xf32>
    %cst_15 = arith.constant 1.000000e+00 : f32
    %22 = vector.broadcast %cst_15 : f32 to vector<8x128xf32>
    %23 = arith.divf %22, %21 : vector<8x128xf32>
    %24 = vector.extract_strided_slice %15 {offsets = [0, 128], sizes = [8, 128], strides = [1, 1]} : vector<8x512xf32> to vector<8x128xf32>
    %cst_16 = arith.constant 0.000000e+00 : f32
    %25 = vector.broadcast %cst_16 : f32 to vector<8x128xf32>
    %26 = arith.subf %25, %24 : vector<8x128xf32>
    %27 = math.exp %26 : vector<8x128xf32>
    %cst_17 = arith.constant 1.000000e+00 : f32
    %28 = vector.broadcast %cst_17 : f32 to vector<8x128xf32>
    %29 = arith.addf %28, %27 : vector<8x128xf32>
    %cst_18 = arith.constant 1.000000e+00 : f32
    %30 = vector.broadcast %cst_18 : f32 to vector<8x128xf32>
    %31 = arith.divf %30, %29 : vector<8x128xf32>
    %32 = vector.extract_strided_slice %15 {offsets = [0, 256], sizes = [8, 128], strides = [1, 1]} : vector<8x512xf32> to vector<8x128xf32>
    %33 = math.tanh %32 : vector<8x128xf32>
    %34 = vector.extract_strided_slice %15 {offsets = [0, 384], sizes = [8, 128], strides = [1, 1]} : vector<8x512xf32> to vector<8x128xf32>
    %cst_19 = arith.constant 0.000000e+00 : f32
    %35 = vector.broadcast %cst_19 : f32 to vector<8x128xf32>
    %36 = arith.subf %35, %34 : vector<8x128xf32>
    %37 = math.exp %36 : vector<8x128xf32>
    %cst_20 = arith.constant 1.000000e+00 : f32
    %38 = vector.broadcast %cst_20 : f32 to vector<8x128xf32>
    %39 = arith.addf %38, %37 : vector<8x128xf32>
    %cst_21 = arith.constant 1.000000e+00 : f32
    %40 = vector.broadcast %cst_21 : f32 to vector<8x128xf32>
    %41 = arith.divf %40, %39 : vector<8x128xf32>
    %42 = arith.mulf %31, %9 : vector<8x128xf32>
    %43 = arith.mulf %23, %33 : vector<8x128xf32>
    %44 = arith.addf %42, %43 : vector<8x128xf32>
    %45 = math.tanh %44 : vector<8x128xf32>
    %46 = arith.mulf %41, %45 : vector<8x128xf32>
    %c1_i32 = arith.constant 1 : i32
    %c8_i32_22 = arith.constant 8 : i32
    %47 = arith.muli %c1_i32, %c8_i32_22 : i32
    %48 = tpu.assume_multiple %47, 8 : i32
    %cst_23 = arith.constant dense<0.000000e+00> : vector<8x512xf32>
    %49 = tpu.matmul %46, %7, %cst_23 {dimension_numbers = #tpu.dot_dimension_numbers<[1], [0], [0], [1], [0, 0, 1, 1], [], []>} : vector<8x128xf32>, vector<128x512xf32>, vector<8x512xf32> -> vector<8x512xf32>
    %50 = arith.index_cast %48 : i32 to index
    %c0_24 = arith.constant 0 : index
    %51 = vector.load %arg11[%50, %c0_24] : memref<64x512xf32, #tpu.memory_space<vmem>>, vector<8x512xf32>
    %52 = arith.addf %49, %51 : vector<8x512xf32>
    %53 = vector.extract_strided_slice %52 {offsets = [0, 0], sizes = [8, 128], strides = [1, 1]} : vector<8x512xf32> to vector<8x128xf32>
    %cst_25 = arith.constant 0.000000e+00 : f32
    %54 = vector.broadcast %cst_25 : f32 to vector<8x128xf32>
    %55 = arith.subf %54, %53 : vector<8x128xf32>
    %56 = math.exp %55 : vector<8x128xf32>
    %cst_26 = arith.constant 1.000000e+00 : f32
    %57 = vector.broadcast %cst_26 : f32 to vector<8x128xf32>
    %58 = arith.addf %57, %56 : vector<8x128xf32>
    %cst_27 = arith.constant 1.000000e+00 : f32
    %59 = vector.broadcast %cst_27 : f32 to vector<8x128xf32>
    %60 = arith.divf %59, %58 : vector<8x128xf32>
    %61 = vector.extract_strided_slice %52 {offsets = [0, 128], sizes = [8, 128], strides = [1, 1]} : vector<8x512xf32> to vector<8x128xf32>
    %cst_28 = arith.constant 0.000000e+00 : f32
    %62 = vector.broadcast %cst_28 : f32 to vector<8x128xf32>
    %63 = arith.subf %62, %61 : vector<8x128xf32>
    %64 = math.exp %63 : vector<8x128xf32>
    %cst_29 = arith.constant 1.000000e+00 : f32
    %65 = vector.broadcast %cst_29 : f32 to vector<8x128xf32>
    %66 = arith.addf %65, %64 : vector<8x128xf32>
    %cst_30 = arith.constant 1.000000e+00 : f32
    %67 = vector.broadcast %cst_30 : f32 to vector<8x128xf32>
    %68 = arith.divf %67, %66 : vector<8x128xf32>
    %69 = vector.extract_strided_slice %52 {offsets = [0, 256], sizes = [8, 128], strides = [1, 1]} : vector<8x512xf32> to vector<8x128xf32>
    %70 = math.tanh %69 : vector<8x128xf32>
    %71 = vector.extract_strided_slice %52 {offsets = [0, 384], sizes = [8, 128], strides = [1, 1]} : vector<8x512xf32> to vector<8x128xf32>
    %cst_31 = arith.constant 0.000000e+00 : f32
    %72 = vector.broadcast %cst_31 : f32 to vector<8x128xf32>
    %73 = arith.subf %72, %71 : vector<8x128xf32>
    %74 = math.exp %73 : vector<8x128xf32>
    %cst_32 = arith.constant 1.000000e+00 : f32
    %75 = vector.broadcast %cst_32 : f32 to vector<8x128xf32>
    %76 = arith.addf %75, %74 : vector<8x128xf32>
    %cst_33 = arith.constant 1.000000e+00 : f32
    %77 = vector.broadcast %cst_33 : f32 to vector<8x128xf32>
    %78 = arith.divf %77, %76 : vector<8x128xf32>
    %79 = arith.mulf %68, %44 : vector<8x128xf32>
    %80 = arith.mulf %60, %70 : vector<8x128xf32>
    %81 = arith.addf %79, %80 : vector<8x128xf32>
    %82 = math.tanh %81 : vector<8x128xf32>
    %83 = arith.mulf %78, %82 : vector<8x128xf32>
    %c2_i32 = arith.constant 2 : i32
    %c8_i32_34 = arith.constant 8 : i32
    %84 = arith.muli %c2_i32, %c8_i32_34 : i32
    %85 = tpu.assume_multiple %84, 8 : i32
    %cst_35 = arith.constant dense<0.000000e+00> : vector<8x512xf32>
    %86 = tpu.matmul %83, %7, %cst_35 {dimension_numbers = #tpu.dot_dimension_numbers<[1], [0], [0], [1], [0, 0, 1, 1], [], []>} : vector<8x128xf32>, vector<128x512xf32>, vector<8x512xf32> -> vector<8x512xf32>
    %87 = arith.index_cast %85 : i32 to index
    %c0_36 = arith.constant 0 : index
    %88 = vector.load %arg11[%87, %c0_36] : memref<64x512xf32, #tpu.memory_space<vmem>>, vector<8x512xf32>
    %89 = arith.addf %86, %88 : vector<8x512xf32>
    %90 = vector.extract_strided_slice %89 {offsets = [0, 0], sizes = [8, 128], strides = [1, 1]} : vector<8x512xf32> to vector<8x128xf32>
    %cst_37 = arith.constant 0.000000e+00 : f32
    %91 = vector.broadcast %cst_37 : f32 to vector<8x128xf32>
    %92 = arith.subf %91, %90 : vector<8x128xf32>
    %93 = math.exp %92 : vector<8x128xf32>
    %cst_38 = arith.constant 1.000000e+00 : f32
    %94 = vector.broadcast %cst_38 : f32 to vector<8x128xf32>
    %95 = arith.addf %94, %93 : vector<8x128xf32>
    %cst_39 = arith.constant 1.000000e+00 : f32
    %96 = vector.broadcast %cst_39 : f32 to vector<8x128xf32>
    %97 = arith.divf %96, %95 : vector<8x128xf32>
    %98 = vector.extract_strided_slice %89 {offsets = [0, 128], sizes = [8, 128], strides = [1, 1]} : vector<8x512xf32> to vector<8x128xf32>
    %cst_40 = arith.constant 0.000000e+00 : f32
    %99 = vector.broadcast %cst_40 : f32 to vector<8x128xf32>
    %100 = arith.subf %99, %98 : vector<8x128xf32>
    %101 = math.exp %100 : vector<8x128xf32>
    %cst_41 = arith.constant 1.000000e+00 : f32
    %102 = vector.broadcast %cst_41 : f32 to vector<8x128xf32>
    %103 = arith.addf %102, %101 : vector<8x128xf32>
    %cst_42 = arith.constant 1.000000e+00 : f32
    %104 = vector.broadcast %cst_42 : f32 to vector<8x128xf32>
    %105 = arith.divf %104, %103 : vector<8x128xf32>
    %106 = vector.extract_strided_slice %89 {offsets = [0, 256], sizes = [8, 128], strides = [1, 1]} : vector<8x512xf32> to vector<8x128xf32>
    %107 = math.tanh %106 : vector<8x128xf32>
    %108 = vector.extract_strided_slice %89 {offsets = [0, 384], sizes = [8, 128], strides = [1, 1]} : vector<8x512xf32> to vector<8x128xf32>
    %cst_43 = arith.constant 0.000000e+00 : f32
    %109 = vector.broadcast %cst_43 : f32 to vector<8x128xf32>
    %110 = arith.subf %109, %108 : vector<8x128xf32>
    %111 = math.exp %110 : vector<8x128xf32>
    %cst_44 = arith.constant 1.000000e+00 : f32
    %112 = vector.broadcast %cst_44 : f32 to vector<8x128xf32>
    %113 = arith.addf %112, %111 : vector<8x128xf32>
    %cst_45 = arith.constant 1.000000e+00 : f32
    %114 = vector.broadcast %cst_45 : f32 to vector<8x128xf32>
    %115 = arith.divf %114, %113 : vector<8x128xf32>
    %116 = arith.mulf %105, %81 : vector<8x128xf32>
    %117 = arith.mulf %97, %107 : vector<8x128xf32>
    %118 = arith.addf %116, %117 : vector<8x128xf32>
    %119 = math.tanh %118 : vector<8x128xf32>
    %120 = arith.mulf %115, %119 : vector<8x128xf32>
    %c3_i32 = arith.constant 3 : i32
    %c8_i32_46 = arith.constant 8 : i32
    %121 = arith.muli %c3_i32, %c8_i32_46 : i32
    %122 = tpu.assume_multiple %121, 8 : i32
    %cst_47 = arith.constant dense<0.000000e+00> : vector<8x512xf32>
    %123 = tpu.matmul %120, %7, %cst_47 {dimension_numbers = #tpu.dot_dimension_numbers<[1], [0], [0], [1], [0, 0, 1, 1], [], []>} : vector<8x128xf32>, vector<128x512xf32>, vector<8x512xf32> -> vector<8x512xf32>
    %124 = arith.index_cast %122 : i32 to index
    %c0_48 = arith.constant 0 : index
    %125 = vector.load %arg11[%124, %c0_48] : memref<64x512xf32, #tpu.memory_space<vmem>>, vector<8x512xf32>
    %126 = arith.addf %123, %125 : vector<8x512xf32>
    %127 = vector.extract_strided_slice %126 {offsets = [0, 0], sizes = [8, 128], strides = [1, 1]} : vector<8x512xf32> to vector<8x128xf32>
    %cst_49 = arith.constant 0.000000e+00 : f32
    %128 = vector.broadcast %cst_49 : f32 to vector<8x128xf32>
    %129 = arith.subf %128, %127 : vector<8x128xf32>
    %130 = math.exp %129 : vector<8x128xf32>
    %cst_50 = arith.constant 1.000000e+00 : f32
    %131 = vector.broadcast %cst_50 : f32 to vector<8x128xf32>
    %132 = arith.addf %131, %130 : vector<8x128xf32>
    %cst_51 = arith.constant 1.000000e+00 : f32
    %133 = vector.broadcast %cst_51 : f32 to vector<8x128xf32>
    %134 = arith.divf %133, %132 : vector<8x128xf32>
    %135 = vector.extract_strided_slice %126 {offsets = [0, 128], sizes = [8, 128], strides = [1, 1]} : vector<8x512xf32> to vector<8x128xf32>
    %cst_52 = arith.constant 0.000000e+00 : f32
    %136 = vector.broadcast %cst_52 : f32 to vector<8x128xf32>
    %137 = arith.subf %136, %135 : vector<8x128xf32>
    %138 = math.exp %137 : vector<8x128xf32>
    %cst_53 = arith.constant 1.000000e+00 : f32
    %139 = vector.broadcast %cst_53 : f32 to vector<8x128xf32>
    %140 = arith.addf %139, %138 : vector<8x128xf32>
    %cst_54 = arith.constant 1.000000e+00 : f32
    %141 = vector.broadcast %cst_54 : f32 to vector<8x128xf32>
    %142 = arith.divf %141, %140 : vector<8x128xf32>
    %143 = vector.extract_strided_slice %126 {offsets = [0, 256], sizes = [8, 128], strides = [1, 1]} : vector<8x512xf32> to vector<8x128xf32>
    %144 = math.tanh %143 : vector<8x128xf32>
    %145 = vector.extract_strided_slice %126 {offsets = [0, 384], sizes = [8, 128], strides = [1, 1]} : vector<8x512xf32> to vector<8x128xf32>
    %cst_55 = arith.constant 0.000000e+00 : f32
    %146 = vector.broadcast %cst_55 : f32 to vector<8x128xf32>
    %147 = arith.subf %146, %145 : vector<8x128xf32>
    %148 = math.exp %147 : vector<8x128xf32>
    %cst_56 = arith.constant 1.000000e+00 : f32
    %149 = vector.broadcast %cst_56 : f32 to vector<8x128xf32>
    %150 = arith.addf %149, %148 : vector<8x128xf32>
    %cst_57 = arith.constant 1.000000e+00 : f32
    %151 = vector.broadcast %cst_57 : f32 to vector<8x128xf32>
    %152 = arith.divf %151, %150 : vector<8x128xf32>
    %153 = arith.mulf %142, %118 : vector<8x128xf32>
    %154 = arith.mulf %134, %144 : vector<8x128xf32>
    %155 = arith.addf %153, %154 : vector<8x128xf32>
    %156 = math.tanh %155 : vector<8x128xf32>
    %157 = arith.mulf %152, %156 : vector<8x128xf32>
    %c4_i32 = arith.constant 4 : i32
    %c8_i32_58 = arith.constant 8 : i32
    %158 = arith.muli %c4_i32, %c8_i32_58 : i32
    %159 = tpu.assume_multiple %158, 8 : i32
    %cst_59 = arith.constant dense<0.000000e+00> : vector<8x512xf32>
    %160 = tpu.matmul %157, %7, %cst_59 {dimension_numbers = #tpu.dot_dimension_numbers<[1], [0], [0], [1], [0, 0, 1, 1], [], []>} : vector<8x128xf32>, vector<128x512xf32>, vector<8x512xf32> -> vector<8x512xf32>
    %161 = arith.index_cast %159 : i32 to index
    %c0_60 = arith.constant 0 : index
    %162 = vector.load %arg11[%161, %c0_60] : memref<64x512xf32, #tpu.memory_space<vmem>>, vector<8x512xf32>
    %163 = arith.addf %160, %162 : vector<8x512xf32>
    %164 = vector.extract_strided_slice %163 {offsets = [0, 0], sizes = [8, 128], strides = [1, 1]} : vector<8x512xf32> to vector<8x128xf32>
    %cst_61 = arith.constant 0.000000e+00 : f32
    %165 = vector.broadcast %cst_61 : f32 to vector<8x128xf32>
    %166 = arith.subf %165, %164 : vector<8x128xf32>
    %167 = math.exp %166 : vector<8x128xf32>
    %cst_62 = arith.constant 1.000000e+00 : f32
    %168 = vector.broadcast %cst_62 : f32 to vector<8x128xf32>
    %169 = arith.addf %168, %167 : vector<8x128xf32>
    %cst_63 = arith.constant 1.000000e+00 : f32
    %170 = vector.broadcast %cst_63 : f32 to vector<8x128xf32>
    %171 = arith.divf %170, %169 : vector<8x128xf32>
    %172 = vector.extract_strided_slice %163 {offsets = [0, 128], sizes = [8, 128], strides = [1, 1]} : vector<8x512xf32> to vector<8x128xf32>
    %cst_64 = arith.constant 0.000000e+00 : f32
    %173 = vector.broadcast %cst_64 : f32 to vector<8x128xf32>
    %174 = arith.subf %173, %172 : vector<8x128xf32>
    %175 = math.exp %174 : vector<8x128xf32>
    %cst_65 = arith.constant 1.000000e+00 : f32
    %176 = vector.broadcast %cst_65 : f32 to vector<8x128xf32>
    %177 = arith.addf %176, %175 : vector<8x128xf32>
    %cst_66 = arith.constant 1.000000e+00 : f32
    %178 = vector.broadcast %cst_66 : f32 to vector<8x128xf32>
    %179 = arith.divf %178, %177 : vector<8x128xf32>
    %180 = vector.extract_strided_slice %163 {offsets = [0, 256], sizes = [8, 128], strides = [1, 1]} : vector<8x512xf32> to vector<8x128xf32>
    %181 = math.tanh %180 : vector<8x128xf32>
    %182 = vector.extract_strided_slice %163 {offsets = [0, 384], sizes = [8, 128], strides = [1, 1]} : vector<8x512xf32> to vector<8x128xf32>
    %cst_67 = arith.constant 0.000000e+00 : f32
    %183 = vector.broadcast %cst_67 : f32 to vector<8x128xf32>
    %184 = arith.subf %183, %182 : vector<8x128xf32>
    %185 = math.exp %184 : vector<8x128xf32>
    %cst_68 = arith.constant 1.000000e+00 : f32
    %186 = vector.broadcast %cst_68 : f32 to vector<8x128xf32>
    %187 = arith.addf %186, %185 : vector<8x128xf32>
    %cst_69 = arith.constant 1.000000e+00 : f32
    %188 = vector.broadcast %cst_69 : f32 to vector<8x128xf32>
    %189 = arith.divf %188, %187 : vector<8x128xf32>
    %190 = arith.mulf %179, %155 : vector<8x128xf32>
    %191 = arith.mulf %171, %181 : vector<8x128xf32>
    %192 = arith.addf %190, %191 : vector<8x128xf32>
    %193 = math.tanh %192 : vector<8x128xf32>
    %194 = arith.mulf %189, %193 : vector<8x128xf32>
    %c5_i32 = arith.constant 5 : i32
    %c8_i32_70 = arith.constant 8 : i32
    %195 = arith.muli %c5_i32, %c8_i32_70 : i32
    %196 = tpu.assume_multiple %195, 8 : i32
    %cst_71 = arith.constant dense<0.000000e+00> : vector<8x512xf32>
    %197 = tpu.matmul %194, %7, %cst_71 {dimension_numbers = #tpu.dot_dimension_numbers<[1], [0], [0], [1], [0, 0, 1, 1], [], []>} : vector<8x128xf32>, vector<128x512xf32>, vector<8x512xf32> -> vector<8x512xf32>
    %198 = arith.index_cast %196 : i32 to index
    %c0_72 = arith.constant 0 : index
    %199 = vector.load %arg11[%198, %c0_72] : memref<64x512xf32, #tpu.memory_space<vmem>>, vector<8x512xf32>
    %200 = arith.addf %197, %199 : vector<8x512xf32>
    %201 = vector.extract_strided_slice %200 {offsets = [0, 0], sizes = [8, 128], strides = [1, 1]} : vector<8x512xf32> to vector<8x128xf32>
    %cst_73 = arith.constant 0.000000e+00 : f32
    %202 = vector.broadcast %cst_73 : f32 to vector<8x128xf32>
    %203 = arith.subf %202, %201 : vector<8x128xf32>
    %204 = math.exp %203 : vector<8x128xf32>
    %cst_74 = arith.constant 1.000000e+00 : f32
    %205 = vector.broadcast %cst_74 : f32 to vector<8x128xf32>
    %206 = arith.addf %205, %204 : vector<8x128xf32>
    %cst_75 = arith.constant 1.000000e+00 : f32
    %207 = vector.broadcast %cst_75 : f32 to vector<8x128xf32>
    %208 = arith.divf %207, %206 : vector<8x128xf32>
    %209 = vector.extract_strided_slice %200 {offsets = [0, 128], sizes = [8, 128], strides = [1, 1]} : vector<8x512xf32> to vector<8x128xf32>
    %cst_76 = arith.constant 0.000000e+00 : f32
    %210 = vector.broadcast %cst_76 : f32 to vector<8x128xf32>
    %211 = arith.subf %210, %209 : vector<8x128xf32>
    %212 = math.exp %211 : vector<8x128xf32>
    %cst_77 = arith.constant 1.000000e+00 : f32
    %213 = vector.broadcast %cst_77 : f32 to vector<8x128xf32>
    %214 = arith.addf %213, %212 : vector<8x128xf32>
    %cst_78 = arith.constant 1.000000e+00 : f32
    %215 = vector.broadcast %cst_78 : f32 to vector<8x128xf32>
    %216 = arith.divf %215, %214 : vector<8x128xf32>
    %217 = vector.extract_strided_slice %200 {offsets = [0, 256], sizes = [8, 128], strides = [1, 1]} : vector<8x512xf32> to vector<8x128xf32>
    %218 = math.tanh %217 : vector<8x128xf32>
    %219 = vector.extract_strided_slice %200 {offsets = [0, 384], sizes = [8, 128], strides = [1, 1]} : vector<8x512xf32> to vector<8x128xf32>
    %cst_79 = arith.constant 0.000000e+00 : f32
    %220 = vector.broadcast %cst_79 : f32 to vector<8x128xf32>
    %221 = arith.subf %220, %219 : vector<8x128xf32>
    %222 = math.exp %221 : vector<8x128xf32>
    %cst_80 = arith.constant 1.000000e+00 : f32
    %223 = vector.broadcast %cst_80 : f32 to vector<8x128xf32>
    %224 = arith.addf %223, %222 : vector<8x128xf32>
    %cst_81 = arith.constant 1.000000e+00 : f32
    %225 = vector.broadcast %cst_81 : f32 to vector<8x128xf32>
    %226 = arith.divf %225, %224 : vector<8x128xf32>
    %227 = arith.mulf %216, %192 : vector<8x128xf32>
    %228 = arith.mulf %208, %218 : vector<8x128xf32>
    %229 = arith.addf %227, %228 : vector<8x128xf32>
    %230 = math.tanh %229 : vector<8x128xf32>
    %231 = arith.mulf %226, %230 : vector<8x128xf32>
    %c6_i32 = arith.constant 6 : i32
    %c8_i32_82 = arith.constant 8 : i32
    %232 = arith.muli %c6_i32, %c8_i32_82 : i32
    %233 = tpu.assume_multiple %232, 8 : i32
    %cst_83 = arith.constant dense<0.000000e+00> : vector<8x512xf32>
    %234 = tpu.matmul %231, %7, %cst_83 {dimension_numbers = #tpu.dot_dimension_numbers<[1], [0], [0], [1], [0, 0, 1, 1], [], []>} : vector<8x128xf32>, vector<128x512xf32>, vector<8x512xf32> -> vector<8x512xf32>
    %235 = arith.index_cast %233 : i32 to index
    %c0_84 = arith.constant 0 : index
    %236 = vector.load %arg11[%235, %c0_84] : memref<64x512xf32, #tpu.memory_space<vmem>>, vector<8x512xf32>
    %237 = arith.addf %234, %236 : vector<8x512xf32>
    %238 = vector.extract_strided_slice %237 {offsets = [0, 0], sizes = [8, 128], strides = [1, 1]} : vector<8x512xf32> to vector<8x128xf32>
    %cst_85 = arith.constant 0.000000e+00 : f32
    %239 = vector.broadcast %cst_85 : f32 to vector<8x128xf32>
    %240 = arith.subf %239, %238 : vector<8x128xf32>
    %241 = math.exp %240 : vector<8x128xf32>
    %cst_86 = arith.constant 1.000000e+00 : f32
    %242 = vector.broadcast %cst_86 : f32 to vector<8x128xf32>
    %243 = arith.addf %242, %241 : vector<8x128xf32>
    %cst_87 = arith.constant 1.000000e+00 : f32
    %244 = vector.broadcast %cst_87 : f32 to vector<8x128xf32>
    %245 = arith.divf %244, %243 : vector<8x128xf32>
    %246 = vector.extract_strided_slice %237 {offsets = [0, 128], sizes = [8, 128], strides = [1, 1]} : vector<8x512xf32> to vector<8x128xf32>
    %cst_88 = arith.constant 0.000000e+00 : f32
    %247 = vector.broadcast %cst_88 : f32 to vector<8x128xf32>
    %248 = arith.subf %247, %246 : vector<8x128xf32>
    %249 = math.exp %248 : vector<8x128xf32>
    %cst_89 = arith.constant 1.000000e+00 : f32
    %250 = vector.broadcast %cst_89 : f32 to vector<8x128xf32>
    %251 = arith.addf %250, %249 : vector<8x128xf32>
    %cst_90 = arith.constant 1.000000e+00 : f32
    %252 = vector.broadcast %cst_90 : f32 to vector<8x128xf32>
    %253 = arith.divf %252, %251 : vector<8x128xf32>
    %254 = vector.extract_strided_slice %237 {offsets = [0, 256], sizes = [8, 128], strides = [1, 1]} : vector<8x512xf32> to vector<8x128xf32>
    %255 = math.tanh %254 : vector<8x128xf32>
    %256 = vector.extract_strided_slice %237 {offsets = [0, 384], sizes = [8, 128], strides = [1, 1]} : vector<8x512xf32> to vector<8x128xf32>
    %cst_91 = arith.constant 0.000000e+00 : f32
    %257 = vector.broadcast %cst_91 : f32 to vector<8x128xf32>
    %258 = arith.subf %257, %256 : vector<8x128xf32>
    %259 = math.exp %258 : vector<8x128xf32>
    %cst_92 = arith.constant 1.000000e+00 : f32
    %260 = vector.broadcast %cst_92 : f32 to vector<8x128xf32>
    %261 = arith.addf %260, %259 : vector<8x128xf32>
    %cst_93 = arith.constant 1.000000e+00 : f32
    %262 = vector.broadcast %cst_93 : f32 to vector<8x128xf32>
    %263 = arith.divf %262, %261 : vector<8x128xf32>
    %264 = arith.mulf %253, %229 : vector<8x128xf32>
    %265 = arith.mulf %245, %255 : vector<8x128xf32>
    %266 = arith.addf %264, %265 : vector<8x128xf32>
    %267 = math.tanh %266 : vector<8x128xf32>
    %268 = arith.mulf %263, %267 : vector<8x128xf32>
    %c7_i32 = arith.constant 7 : i32
    %c8_i32_94 = arith.constant 8 : i32
    %269 = arith.muli %c7_i32, %c8_i32_94 : i32
    %270 = tpu.assume_multiple %269, 8 : i32
    %cst_95 = arith.constant dense<0.000000e+00> : vector<8x512xf32>
    %271 = tpu.matmul %268, %7, %cst_95 {dimension_numbers = #tpu.dot_dimension_numbers<[1], [0], [0], [1], [0, 0, 1, 1], [], []>} : vector<8x128xf32>, vector<128x512xf32>, vector<8x512xf32> -> vector<8x512xf32>
    %272 = arith.index_cast %270 : i32 to index
    %c0_96 = arith.constant 0 : index
    %273 = vector.load %arg11[%272, %c0_96] : memref<64x512xf32, #tpu.memory_space<vmem>>, vector<8x512xf32>
    %274 = arith.addf %271, %273 : vector<8x512xf32>
    %275 = vector.extract_strided_slice %274 {offsets = [0, 0], sizes = [8, 128], strides = [1, 1]} : vector<8x512xf32> to vector<8x128xf32>
    %cst_97 = arith.constant 0.000000e+00 : f32
    %276 = vector.broadcast %cst_97 : f32 to vector<8x128xf32>
    %277 = arith.subf %276, %275 : vector<8x128xf32>
    %278 = math.exp %277 : vector<8x128xf32>
    %cst_98 = arith.constant 1.000000e+00 : f32
    %279 = vector.broadcast %cst_98 : f32 to vector<8x128xf32>
    %280 = arith.addf %279, %278 : vector<8x128xf32>
    %cst_99 = arith.constant 1.000000e+00 : f32
    %281 = vector.broadcast %cst_99 : f32 to vector<8x128xf32>
    %282 = arith.divf %281, %280 : vector<8x128xf32>
    %283 = vector.extract_strided_slice %274 {offsets = [0, 128], sizes = [8, 128], strides = [1, 1]} : vector<8x512xf32> to vector<8x128xf32>
    %cst_100 = arith.constant 0.000000e+00 : f32
    %284 = vector.broadcast %cst_100 : f32 to vector<8x128xf32>
    %285 = arith.subf %284, %283 : vector<8x128xf32>
    %286 = math.exp %285 : vector<8x128xf32>
    %cst_101 = arith.constant 1.000000e+00 : f32
    %287 = vector.broadcast %cst_101 : f32 to vector<8x128xf32>
    %288 = arith.addf %287, %286 : vector<8x128xf32>
    %cst_102 = arith.constant 1.000000e+00 : f32
    %289 = vector.broadcast %cst_102 : f32 to vector<8x128xf32>
    %290 = arith.divf %289, %288 : vector<8x128xf32>
    %291 = vector.extract_strided_slice %274 {offsets = [0, 256], sizes = [8, 128], strides = [1, 1]} : vector<8x512xf32> to vector<8x128xf32>
    %292 = math.tanh %291 : vector<8x128xf32>
    %293 = vector.extract_strided_slice %274 {offsets = [0, 384], sizes = [8, 128], strides = [1, 1]} : vector<8x512xf32> to vector<8x128xf32>
    %cst_103 = arith.constant 0.000000e+00 : f32
    %294 = vector.broadcast %cst_103 : f32 to vector<8x128xf32>
    %295 = arith.subf %294, %293 : vector<8x128xf32>
    %296 = math.exp %295 : vector<8x128xf32>
    %cst_104 = arith.constant 1.000000e+00 : f32
    %297 = vector.broadcast %cst_104 : f32 to vector<8x128xf32>
    %298 = arith.addf %297, %296 : vector<8x128xf32>
    %cst_105 = arith.constant 1.000000e+00 : f32
    %299 = vector.broadcast %cst_105 : f32 to vector<8x128xf32>
    %300 = arith.divf %299, %298 : vector<8x128xf32>
    %301 = arith.mulf %290, %266 : vector<8x128xf32>
    %302 = arith.mulf %282, %292 : vector<8x128xf32>
    %303 = arith.addf %301, %302 : vector<8x128xf32>
    %304 = math.tanh %303 : vector<8x128xf32>
    %305 = arith.mulf %300, %304 : vector<8x128xf32>
    %c8_i32_106 = arith.constant 8 : i32
    %c0_107 = arith.constant 0 : index
    %c0_108 = arith.constant 0 : index
    %306 = vector.load %arg5[%c0_107, %c0_108] : memref<128x32xf32, #tpu.memory_space<vmem>>, vector<128x32xf32>
    %cst_109 = arith.constant dense<0.000000e+00> : vector<8x32xf32>
    %307 = tpu.matmul %305, %306, %cst_109 {dimension_numbers = #tpu.dot_dimension_numbers<[1], [0], [0], [1], [0, 0, 1, 1], [], []>} : vector<8x128xf32>, vector<128x32xf32>, vector<8x32xf32> -> vector<8x32xf32>
    %c0_110 = arith.constant 0 : index
    %c0_111 = arith.constant 0 : index
    %308 = vector.load %arg1[%c0_110, %c0_111] : memref<8x32xf32, #tpu.memory_space<vmem>>, vector<8x32xf32>
    %c0_112 = arith.constant 0 : index
    %c0_113 = arith.constant 0 : index
    %309 = vector.load %arg6[%c0_112, %c0_113] : memref<32x32xf32, #tpu.memory_space<vmem>>, vector<32x32xf32>
    %cst_114 = arith.constant dense<0.000000e+00> : vector<8x32xf32>
    %310 = tpu.matmul %308, %309, %cst_114 {dimension_numbers = #tpu.dot_dimension_numbers<[1], [0], [0], [1], [0, 0, 1, 1], [], []>} : vector<8x32xf32>, vector<32x32xf32>, vector<8x32xf32> -> vector<8x32xf32>
    %311 = arith.addf %307, %310 : vector<8x32xf32>
    %c0_115 = arith.constant 0 : index
    %c0_116 = arith.constant 0 : index
    %312 = vector.load %arg7[%c0_115, %c0_116] : memref<1x32xf32, #tpu.memory_space<vmem>>, vector<1x32xf32>
    %313 = vector.broadcast %312 : vector<1x32xf32> to vector<8x32xf32>
    %314 = arith.addf %311, %313 : vector<8x32xf32>
    %cst_117 = arith.constant 0.000000e+00 : f32
    %315 = vector.broadcast %cst_117 : f32 to vector<8x32xf32>
    %316 = arith.maximumf %314, %315 : vector<8x32xf32>
    %c0_118 = arith.constant 0 : index
    %c0_119 = arith.constant 0 : index
    %317 = vector.load %arg8[%c0_118, %c0_119] : memref<32x128xf32, #tpu.memory_space<vmem>>, vector<32x128xf32>
    %cst_120 = arith.constant dense<0.000000e+00> : vector<8x128xf32>
    %318 = tpu.matmul %316, %317, %cst_120 {dimension_numbers = #tpu.dot_dimension_numbers<[1], [0], [0], [1], [0, 0, 1, 1], [], []>} : vector<8x32xf32>, vector<32x128xf32>, vector<8x128xf32> -> vector<8x128xf32>
    %c0_121 = arith.constant 0 : index
    %c0_122 = arith.constant 0 : index
    %319 = vector.load %arg9[%c0_121, %c0_122] : memref<1x128xf32, #tpu.memory_space<vmem>>, vector<1x128xf32>
    %320 = vector.broadcast %319 : vector<1x128xf32> to vector<8x128xf32>
    %321 = arith.addf %318, %320 : vector<8x128xf32>
    %c0_123 = arith.constant 0 : index
    %c0_124 = arith.constant 0 : index
    %322 = vector.load %arg10[%c0_123, %c0_124] : memref<8x128xf32, #tpu.memory_space<vmem>>, vector<8x128xf32>
    tpu.vector_store %arg10[%c0_123, %c0_124], %321 {strides = array<i32>} : memref<8x128xf32, #tpu.memory_space<vmem>>, vector<8x128xf32>,
    return
  }
}

</mosaic_0001>

<llo_original>
// kernel: binary_model_forward.1
$region0: #{binary_model_forward.1}
  #allocation0 [shape = 'u32[]', space=smem, size = 0x4, offset = 0x4, fixed_abs, tag = 'smem constant byte address 0x4 - core index']
  #allocation1 [shape = 'u32[72,128]{1,0:T(1,128)}', space=vmem, size = 0x9000, scoped, tag = 'internal scratch']
  #allocation2 [shape = 'f32[64,512]{1,0:T(8,128)}', space=vmem, size = 0x20000, scoped, tag = 'scratch operand']
  %s0 = inlined_call_operand.vmem [shape: f32[64,128], index: 0, kind: input, shape index: {}]
  %s1 = inlined_call_operand.vmem [shape: f32[8,32], index: 1, kind: input, shape index: {}]
  %s2 = inlined_call_operand.vmem [shape: f32[128,512], index: 2, kind: input, shape index: {}]
  %s3 = inlined_call_operand.vmem [shape: f32[1,512], index: 3, kind: input, shape index: {}]
  %s4 = inlined_call_operand.vmem [shape: f32[128,512], index: 4, kind: input, shape index: {}]
  %s5 = inlined_call_operand.vmem [shape: f32[128,32], index: 5, kind: input, shape index: {}]
  %s6 = inlined_call_operand.vmem [shape: f32[32,32], index: 6, kind: input, shape index: {}]
  %s7 = inlined_call_operand.vmem [shape: f32[1,32], index: 7, kind: input, shape index: {}]
  %s8 = inlined_call_operand.vmem [shape: f32[32,128], index: 8, kind: input, shape index: {}]
  %s9 = inlined_call_operand.vmem [shape: f32[1,128], index: 9, kind: input, shape index: {}]
  %s10 = inlined_call_operand.vmem [shape: f32[8,128], index: 10, kind: output, shape index: {}]
  %s11 = sld [smem:[#allocation0]]
  $region50: #{binary_model_forward.1} parent=0
    _
  %s13 = ssub.s32 1, %s11
  %s14 = scalar_select 0, %s13, %s11
  // Predicated region
  $region2: #{binary_model_forward.1} parent=0 // pred_check
    _
  $region3: #{binary_model_forward.1} parent=0 // pred_check_branch
    %16 = sbr.rel (0) target = $region5
  $region4: #{binary_model_forward.1} parent=0 // pred_region
    _
  $region5: #{binary_model_forward.1} parent=0 // pred_fallthru
    _
  // Predicated region
  $region6: #{binary_model_forward.1} parent=0 // pred_check
    _
  $region7: #{binary_model_forward.1} parent=0 // pred_check_branch
    %18 = sbr.rel (0) target = $region9
  $region8: #{binary_model_forward.1} parent=0 // pred_region
    _
  $region9: #{binary_model_forward.1} parent=0 // pred_fallthru
    _
  // Predicated region
  $region10: #{binary_model_forward.1} parent=0 // pred_check
    _
  $region11: #{binary_model_forward.1} parent=0 // pred_check_branch
    %20 = sbr.rel (0) target = $region13
  $region12: #{binary_model_forward.1} parent=0 // pred_region
    _
  $region13: #{binary_model_forward.1} parent=0 // pred_fallthru
    _
  // Predicated region
  $region14: #{binary_model_forward.1} parent=0 // pred_check
    _
  $region15: #{binary_model_forward.1} parent=0 // pred_check_branch
    %22 = sbr.rel (0) target = $region17
  $region16: #{binary_model_forward.1} parent=0 // pred_region
    _
  $region17: #{binary_model_forward.1} parent=0 // pred_fallthru
    _
  // Predicated region
  $region18: #{binary_model_forward.1} parent=0 // pred_check
    _
  $region19: #{binary_model_forward.1} parent=0 // pred_check_branch
    %24 = sbr.rel (0) target = $region21
  $region20: #{binary_model_forward.1} parent=0 // pred_region
    _
  $region21: #{binary_model_forward.1} parent=0 // pred_fallthru
    _
  // Predicated region
  $region22: #{binary_model_forward.1} parent=0 // pred_check
    _
  $region23: #{binary_model_forward.1} parent=0 // pred_check_branch
    %26 = sbr.rel (0) target = $region25
  $region24: #{binary_model_forward.1} parent=0 // pred_region
    _
  $region25: #{binary_model_forward.1} parent=0 // pred_fallthru
    _
  // Predicated region
  $region26: #{binary_model_forward.1} parent=0 // pred_check
    _
  $region27: #{binary_model_forward.1} parent=0 // pred_check_branch
    %28 = sbr.rel (0) target = $region29
  $region28: #{binary_model_forward.1} parent=0 // pred_region
    _
  $region29: #{binary_model_forward.1} parent=0 // pred_fallthru
    _
  // Predicated region
  $region30: #{binary_model_forward.1} parent=0 // pred_check
    _
  $region31: #{binary_model_forward.1} parent=0 // pred_check_branch
    %30 = sbr.rel (0) target = $region33
  $region32: #{binary_model_forward.1} parent=0 // pred_region
    _
  $region33: #{binary_model_forward.1} parent=0 // pred_fallthru
    _
  // Predicated region
  $region34: #{binary_model_forward.1} parent=0 // pred_check
    _
  $region35: #{binary_model_forward.1} parent=0 // pred_check_branch
    %32 = sbr.rel (0) target = $region37
  $region36: #{binary_model_forward.1} parent=0 // pred_region
    _
  $region37: #{binary_model_forward.1} parent=0 // pred_fallthru
    _
  // Predicated region
  $region38: #{binary_model_forward.1} parent=0 // pred_check
    _
  $region39: #{binary_model_forward.1} parent=0 // pred_check_branch
    %34 = sbr.rel (0) target = $region41
  $region40: #{binary_model_forward.1} parent=0 // pred_region
    _
  $region41: #{binary_model_forward.1} parent=0 // pred_fallthru
    _
  %v35 = vld [vmem:[%s0] sm:$0xff]
  %v36 = vld [vmem:[%s0 + $0x8] sm:$0xff]
  %v37 = vld [vmem:[%s0 + $0x10] sm:$0xff]
  %v38 = vld [vmem:[%s0 + $0x18] sm:$0xff]
  %v39 = vld [vmem:[%s0 + $0x20] sm:$0xff]
  %v40 = vld [vmem:[%s0 + $0x28] sm:$0xff]
  %v41 = vld [vmem:[%s0 + $0x30] sm:$0xff]
  %v42 = vld [vmem:[%s0 + $0x38] sm:$0xff]
  %v43 = vld [vmem:[%s2] sm:$0xff]
  %v44 = vld [vmem:[%s2 + $0x8] sm:$0xff]
  %v45 = vld [vmem:[%s2 + $0x10] sm:$0xff]
  %v46 = vld [vmem:[%s2 + $0x18] sm:$0xff]
  %v47 = vld [vmem:[%s2 + $0x20] sm:$0xff]
  %v48 = vld [vmem:[%s2 + $0x28] sm:$0xff]
  %v49 = vld [vmem:[%s2 + $0x30] sm:$0xff]
  %v50 = vld [vmem:[%s2 + $0x38] sm:$0xff]
  %v51 = vld [vmem:[%s2 + $0x40] sm:$0xff]
  %v52 = vld [vmem:[%s2 + $0x48] sm:$0xff]
  %v53 = vld [vmem:[%s2 + $0x50] sm:$0xff]
  %v54 = vld [vmem:[%s2 + $0x58] sm:$0xff]
  %v55 = vld [vmem:[%s2 + $0x60] sm:$0xff]
  %v56 = vld [vmem:[%s2 + $0x68] sm:$0xff]
  %v57 = vld [vmem:[%s2 + $0x70] sm:$0xff]
  %v58 = vld [vmem:[%s2 + $0x78] sm:$0xff]
  %v59 = vld [vmem:[%s2 + $0x80] sm:$0xff]
  %v60 = vld [vmem:[%s2 + $0x88] sm:$0xff]
  %v61 = vld [vmem:[%s2 + $0x90] sm:$0xff]
  %v62 = vld [vmem:[%s2 + $0x98] sm:$0xff]
  %v63 = vld [vmem:[%s2 + $0xa0] sm:$0xff]
  %v64 = vld [vmem:[%s2 + $0xa8] sm:$0xff]
  %v65 = vld [vmem:[%s2 + $0xb0] sm:$0xff]
  %v66 = vld [vmem:[%s2 + $0xb8] sm:$0xff]
  %v67 = vld [vmem:[%s2 + $0xc0] sm:$0xff]
  %v68 = vld [vmem:[%s2 + $0xc8] sm:$0xff]
  %v69 = vld [vmem:[%s2 + $0xd0] sm:$0xff]
  %v70 = vld [vmem:[%s2 + $0xd8] sm:$0xff]
  %v71 = vld [vmem:[%s2 + $0xe0] sm:$0xff]
  %v72 = vld [vmem:[%s2 + $0xe8] sm:$0xff]
  %v73 = vld [vmem:[%s2 + $0xf0] sm:$0xff]
  %v74 = vld [vmem:[%s2 + $0xf8] sm:$0xff]
  %v75 = vld [vmem:[%s2 + $0x100] sm:$0xff]
  %v76 = vld [vmem:[%s2 + $0x108] sm:$0xff]
  %v77 = vld [vmem:[%s2 + $0x110] sm:$0xff]
  %v78 = vld [vmem:[%s2 + $0x118] sm:$0xff]
  %v79 = vld [vmem:[%s2 + $0x120] sm:$0xff]
  %v80 = vld [vmem:[%s2 + $0x128] sm:$0xff]
  %v81 = vld [vmem:[%s2 + $0x130] sm:$0xff]
  %v82 = vld [vmem:[%s2 + $0x138] sm:$0xff]
  %v83 = vld [vmem:[%s2 + $0x140] sm:$0xff]
  %v84 = vld [vmem:[%s2 + $0x148] sm:$0xff]
  %v85 = vld [vmem:[%s2 + $0x150] sm:$0xff]
  %v86 = vld [vmem:[%s2 + $0x158] sm:$0xff]
  %v87 = vld [vmem:[%s2 + $0x160] sm:$0xff]
  %v88 = vld [vmem:[%s2 + $0x168] sm:$0xff]
  %v89 = vld [vmem:[%s2 + $0x170] sm:$0xff]
  %v90 = vld [vmem:[%s2 + $0x178] sm:$0xff]
  %v91 = vld [vmem:[%s2 + $0x180] sm:$0xff]
  %v92 = vld [vmem:[%s2 + $0x188] sm:$0xff]
  %v93 = vld [vmem:[%s2 + $0x190] sm:$0xff]
  %v94 = vld [vmem:[%s2 + $0x198] sm:$0xff]
  %v95 = vld [vmem:[%s2 + $0x1a0] sm:$0xff]
  %v96 = vld [vmem:[%s2 + $0x1a8] sm:$0xff]
  %v97 = vld [vmem:[%s2 + $0x1b0] sm:$0xff]
  %v98 = vld [vmem:[%s2 + $0x1b8] sm:$0xff]
  %v99 = vld [vmem:[%s2 + $0x1c0] sm:$0xff]
  %v100 = vld [vmem:[%s2 + $0x1c8] sm:$0xff]
  %v101 = vld [vmem:[%s2 + $0x1d0] sm:$0xff]
  %v102 = vld [vmem:[%s2 + $0x1d8] sm:$0xff]
  %v103 = vld [vmem:[%s2 + $0x1e0] sm:$0xff]
  %v104 = vld [vmem:[%s2 + $0x1e8] sm:$0xff]
  %v105 = vld [vmem:[%s2 + $0x1f0] sm:$0xff]
  %v106 = vld [vmem:[%s2 + $0x1f8] sm:$0xff]
  %v107 = vld [vmem:[%s3] sm:$0xf]
  %v109 = vperm.slane %v107, 0
  %v110 = vperm.slane %v107, 1
  %v111 = vperm.slane %v107, 2
  %v112 = vperm.slane %v107, 3
  %117 = vmatpush.msra.mxu0 %v103
  %118 = vmatpush.msra.mxu0 %v99
  %119 = vmatpush.msra.mxu0 %v95
  %120 = vmatpush.msra.mxu0 %v91
  %121 = vmatpush.msra.mxu0 %v87
  %122 = vmatpush.msra.mxu0 %v83
  %123 = vmatpush.msra.mxu0 %v79
  %124 = vmatpush.msra.mxu0 %v75
  %125 = vmatpush.msra.mxu0 %v71
  %126 = vmatpush.msra.mxu0 %v67
  %127 = vmatpush.msra.mxu0 %v63
  %128 = vmatpush.msra.mxu0 %v59
  %129 = vmatpush.msra.mxu0 %v55
  %130 = vmatpush.msra.mxu0 %v51
  %131 = vmatpush.msra.mxu0 %v47
  %132 = vmatpush.msra.mxu0 %v43
  %133 = vmatmul.f32.gmra.mxu0 %v35
  %v134 = vpop.f32.mrf.mxu0
  %v135 = vadd.f32 %v109, %v134
  %136 = vmatmul.f32.gmra.mxu0 %v36
  %v137 = vpop.f32.mrf.mxu0
  %v138 = vadd.f32 %v109, %v137
  %139 = vmatmul.f32.gmra.mxu0 %v37
  %v140 = vpop.f32.mrf.mxu0
  %v141 = vadd.f32 %v109, %v140
  %142 = vmatmul.f32.gmra.mxu0 %v38
  %v143 = vpop.f32.mrf.mxu0
  %v144 = vadd.f32 %v109, %v143
  %145 = vmatmul.f32.gmra.mxu0 %v39
  %v146 = vpop.f32.mrf.mxu0
  %v147 = vadd.f32 %v109, %v146
  %148 = vmatmul.f32.gmra.mxu0 %v40
  %v149 = vpop.f32.mrf.mxu0
  %v150 = vadd.f32 %v109, %v149
  %151 = vmatmul.f32.gmra.mxu0 %v41
  %v152 = vpop.f32.mrf.mxu0
  %v153 = vadd.f32 %v109, %v152
  %154 = vmatmul.f32.gmra.mxu0 %v42
  %v155 = vpop.f32.mrf.mxu0
  %v156 = vadd.f32 %v109, %v155
  %157 = vdwg.mxu0
  %158 = vmatpush.msra.mxu0 %v104
  %159 = vmatpush.msra.mxu0 %v100
  %160 = vmatpush.msra.mxu0 %v96
  %161 = vmatpush.msra.mxu0 %v92
  %162 = vmatpush.msra.mxu0 %v88
  %163 = vmatpush.msra.mxu0 %v84
  %164 = vmatpush.msra.mxu0 %v80
  %165 = vmatpush.msra.mxu0 %v76
  %166 = vmatpush.msra.mxu0 %v72
  %167 = vmatpush.msra.mxu0 %v68
  %168 = vmatpush.msra.mxu0 %v64
  %169 = vmatpush.msra.mxu0 %v60
  %170 = vmatpush.msra.mxu0 %v56
  %171 = vmatpush.msra.mxu0 %v52
  %172 = vmatpush.msra.mxu0 %v48
  %173 = vmatpush.msra.mxu0 %v44
  %174 = vmatmul.f32.gmra.mxu0 %v35
  %v175 = vpop.f32.mrf.mxu0
  %v176 = vadd.f32 %v110, %v175
  %177 = vmatmul.f32.gmra.mxu0 %v36
  %v178 = vpop.f32.mrf.mxu0
  %v179 = vadd.f32 %v110, %v178
  %180 = vmatmul.f32.gmra.mxu0 %v37
  %v181 = vpop.f32.mrf.mxu0
  %v182 = vadd.f32 %v110, %v181
  %183 = vmatmul.f32.gmra.mxu0 %v38
  %v184 = vpop.f32.mrf.mxu0
  %v185 = vadd.f32 %v110, %v184
  %186 = vmatmul.f32.gmra.mxu0 %v39
  %v187 = vpop.f32.mrf.mxu0
  %v188 = vadd.f32 %v110, %v187
  %189 = vmatmul.f32.gmra.mxu0 %v40
  %v190 = vpop.f32.mrf.mxu0
  %v191 = vadd.f32 %v110, %v190
  %192 = vmatmul.f32.gmra.mxu0 %v41
  %v193 = vpop.f32.mrf.mxu0
  %v194 = vadd.f32 %v110, %v193
  %195 = vmatmul.f32.gmra.mxu0 %v42
  %v196 = vpop.f32.mrf.mxu0
  %v197 = vadd.f32 %v110, %v196
  %198 = vdwg.mxu0
  %199 = vmatpush.msra.mxu0 %v105
  %200 = vmatpush.msra.mxu0 %v101
  %201 = vmatpush.msra.mxu0 %v97
  %202 = vmatpush.msra.mxu0 %v93
  %203 = vmatpush.msra.mxu0 %v89
  %204 = vmatpush.msra.mxu0 %v85
  %205 = vmatpush.msra.mxu0 %v81
  %206 = vmatpush.msra.mxu0 %v77
  %207 = vmatpush.msra.mxu0 %v73
  %208 = vmatpush.msra.mxu0 %v69
  %209 = vmatpush.msra.mxu0 %v65
  %210 = vmatpush.msra.mxu0 %v61
  %211 = vmatpush.msra.mxu0 %v57
  %212 = vmatpush.msra.mxu0 %v53
  %213 = vmatpush.msra.mxu0 %v49
  %214 = vmatpush.msra.mxu0 %v45
  %215 = vmatmul.f32.gmra.mxu0 %v35
  %v216 = vpop.f32.mrf.mxu0
  %v217 = vadd.f32 %v111, %v216
  %218 = vmatmul.f32.gmra.mxu0 %v36
  %v219 = vpop.f32.mrf.mxu0
  %v220 = vadd.f32 %v111, %v219
  %221 = vmatmul.f32.gmra.mxu0 %v37
  %v222 = vpop.f32.mrf.mxu0
  %v223 = vadd.f32 %v111, %v222
  %224 = vmatmul.f32.gmra.mxu0 %v38
  %v225 = vpop.f32.mrf.mxu0
  %v226 = vadd.f32 %v111, %v225
  %227 = vmatmul.f32.gmra.mxu0 %v39
  %v228 = vpop.f32.mrf.mxu0
  %v229 = vadd.f32 %v111, %v228
  %230 = vmatmul.f32.gmra.mxu0 %v40
  %v231 = vpop.f32.mrf.mxu0
  %v232 = vadd.f32 %v111, %v231
  %233 = vmatmul.f32.gmra.mxu0 %v41
  %v234 = vpop.f32.mrf.mxu0
  %v235 = vadd.f32 %v111, %v234
  %236 = vmatmul.f32.gmra.mxu0 %v42
  %v237 = vpop.f32.mrf.mxu0
  %v238 = vadd.f32 %v111, %v237
  %239 = vdwg.mxu0
  %240 = vmatpush.msra.mxu0 %v106
  %241 = vmatpush.msra.mxu0 %v102
  %242 = vmatpush.msra.mxu0 %v98
  %243 = vmatpush.msra.mxu0 %v94
  %244 = vmatpush.msra.mxu0 %v90
  %245 = vmatpush.msra.mxu0 %v86
  %246 = vmatpush.msra.mxu0 %v82
  %247 = vmatpush.msra.mxu0 %v78
  %248 = vmatpush.msra.mxu0 %v74
  %249 = vmatpush.msra.mxu0 %v70
  %250 = vmatpush.msra.mxu0 %v66
  %251 = vmatpush.msra.mxu0 %v62
  %252 = vmatpush.msra.mxu0 %v58
  %253 = vmatpush.msra.mxu0 %v54
  %254 = vmatpush.msra.mxu0 %v50
  %255 = vmatpush.msra.mxu0 %v46
  %256 = vmatmul.f32.gmra.mxu0 %v35
  %v257 = vpop.f32.mrf.mxu0
  %v258 = vadd.f32 %v112, %v257
  %259 = vmatmul.f32.gmra.mxu0 %v36
  %v260 = vpop.f32.mrf.mxu0
  %v261 = vadd.f32 %v112, %v260
  %262 = vmatmul.f32.gmra.mxu0 %v37
  %v263 = vpop.f32.mrf.mxu0
  %v264 = vadd.f32 %v112, %v263
  %265 = vmatmul.f32.gmra.mxu0 %v38
  %v266 = vpop.f32.mrf.mxu0
  %v267 = vadd.f32 %v112, %v266
  %268 = vmatmul.f32.gmra.mxu0 %v39
  %v269 = vpop.f32.mrf.mxu0
  %v270 = vadd.f32 %v112, %v269
  %271 = vmatmul.f32.gmra.mxu0 %v40
  %v272 = vpop.f32.mrf.mxu0
  %v273 = vadd.f32 %v112, %v272
  %274 = vmatmul.f32.gmra.mxu0 %v41
  %v275 = vpop.f32.mrf.mxu0
  %v276 = vadd.f32 %v112, %v275
  %277 = vmatmul.f32.gmra.mxu0 %v42
  %v278 = vpop.f32.mrf.mxu0
  %v279 = vadd.f32 %v112, %v278
  %280 = vdwg.mxu0
  %281 = vst [vmem:[#allocation2] sm:$0xff] %v135
  %282 = vst [vmem:[#allocation2 + $0x8] sm:$0xff] %v176
  %283 = vst [vmem:[#allocation2 + $0x10] sm:$0xff] %v217
  %284 = vst [vmem:[#allocation2 + $0x18] sm:$0xff] %v258
  %285 = vst [vmem:[#allocation2 + $0x20] sm:$0xff] %v138
  %286 = vst [vmem:[#allocation2 + $0x28] sm:$0xff] %v179
  %287 = vst [vmem:[#allocation2 + $0x30] sm:$0xff] %v220
  %288 = vst [vmem:[#allocation2 + $0x38] sm:$0xff] %v261
  %289 = vst [vmem:[#allocation2 + $0x40] sm:$0xff] %v141
  %290 = vst [vmem:[#allocation2 + $0x48] sm:$0xff] %v182
  %291 = vst [vmem:[#allocation2 + $0x50] sm:$0xff] %v223
  %292 = vst [vmem:[#allocation2 + $0x58] sm:$0xff] %v264
  %293 = vst [vmem:[#allocation2 + $0x60] sm:$0xff] %v144
  %294 = vst [vmem:[#allocation2 + $0x68] sm:$0xff] %v185
  %295 = vst [vmem:[#allocation2 + $0x70] sm:$0xff] %v226
  %296 = vst [vmem:[#allocation2 + $0x78] sm:$0xff] %v267
  %297 = vst [vmem:[#allocation2 + $0x80] sm:$0xff] %v147
  %298 = vst [vmem:[#allocation2 + $0x88] sm:$0xff] %v188
  %299 = vst [vmem:[#allocation2 + $0x90] sm:$0xff] %v229
  %300 = vst [vmem:[#allocation2 + $0x98] sm:$0xff] %v270
  %301 = vst [vmem:[#allocation2 + $0xa0] sm:$0xff] %v150
  %302 = vst [vmem:[#allocation2 + $0xa8] sm:$0xff] %v191
  %303 = vst [vmem:[#allocation2 + $0xb0] sm:$0xff] %v232
  %304 = vst [vmem:[#allocation2 + $0xb8] sm:$0xff] %v273
  %305 = vst [vmem:[#allocation2 + $0xc0] sm:$0xff] %v153
  %306 = vst [vmem:[#allocation2 + $0xc8] sm:$0xff] %v194
  %307 = vst [vmem:[#allocation2 + $0xd0] sm:$0xff] %v235
  %308 = vst [vmem:[#allocation2 + $0xd8] sm:$0xff] %v276
  %309 = vst [vmem:[#allocation2 + $0xe0] sm:$0xff] %v156
  %310 = vst [vmem:[#allocation2 + $0xe8] sm:$0xff] %v197
  %311 = vst [vmem:[#allocation2 + $0xf0] sm:$0xff] %v238
  %312 = vst [vmem:[#allocation2 + $0xf8] sm:$0xff] %v279
  %v313 = vld [vmem:[%s4] sm:$0xff]
  %v314 = vld [vmem:[%s4 + $0x8] sm:$0xff]
  %v315 = vld [vmem:[%s4 + $0x10] sm:$0xff]
  %v316 = vld [vmem:[%s4 + $0x18] sm:$0xff]
  %v317 = vld [vmem:[%s4 + $0x20] sm:$0xff]
  %v318 = vld [vmem:[%s4 + $0x28] sm:$0xff]
  %v319 = vld [vmem:[%s4 + $0x30] sm:$0xff]
  %v320 = vld [vmem:[%s4 + $0x38] sm:$0xff]
  %v321 = vld [vmem:[%s4 + $0x40] sm:$0xff]
  %v322 = vld [vmem:[%s4 + $0x48] sm:$0xff]
  %v323 = vld [vmem:[%s4 + $0x50] sm:$0xff]
  %v324 = vld [vmem:[%s4 + $0x58] sm:$0xff]
  %v325 = vld [vmem:[%s4 + $0x60] sm:$0xff]
  %v326 = vld [vmem:[%s4 + $0x68] sm:$0xff]
  %v327 = vld [vmem:[%s4 + $0x70] sm:$0xff]
  %v328 = vld [vmem:[%s4 + $0x78] sm:$0xff]
  %v329 = vld [vmem:[%s4 + $0x80] sm:$0xff]
  %v330 = vld [vmem:[%s4 + $0x88] sm:$0xff]
  %v331 = vld [vmem:[%s4 + $0x90] sm:$0xff]
  %v332 = vld [vmem:[%s4 + $0x98] sm:$0xff]
  %v333 = vld [vmem:[%s4 + $0xa0] sm:$0xff]
  %v334 = vld [vmem:[%s4 + $0xa8] sm:$0xff]
  %v335 = vld [vmem:[%s4 + $0xb0] sm:$0xff]
  %v336 = vld [vmem:[%s4 + $0xb8] sm:$0xff]
  %v337 = vld [vmem:[%s4 + $0xc0] sm:$0xff]
  %v338 = vld [vmem:[%s4 + $0xc8] sm:$0xff]
  %v339 = vld [vmem:[%s4 + $0xd0] sm:$0xff]
  %v340 = vld [vmem:[%s4 + $0xd8] sm:$0xff]
  %v341 = vld [vmem:[%s4 + $0xe0] sm:$0xff]
  %v342 = vld [vmem:[%s4 + $0xe8] sm:$0xff]
  %v343 = vld [vmem:[%s4 + $0xf0] sm:$0xff]
  %v344 = vld [vmem:[%s4 + $0xf8] sm:$0xff]
  %v345 = vld [vmem:[%s4 + $0x100] sm:$0xff]
  %v346 = vld [vmem:[%s4 + $0x108] sm:$0xff]
  %v347 = vld [vmem:[%s4 + $0x110] sm:$0xff]
  %v348 = vld [vmem:[%s4 + $0x118] sm:$0xff]
  %v349 = vld [vmem:[%s4 + $0x120] sm:$0xff]
  %v350 = vld [vmem:[%s4 + $0x128] sm:$0xff]
  %v351 = vld [vmem:[%s4 + $0x130] sm:$0xff]
  %v352 = vld [vmem:[%s4 + $0x138] sm:$0xff]
  %v353 = vld [vmem:[%s4 + $0x140] sm:$0xff]
  %v354 = vld [vmem:[%s4 + $0x148] sm:$0xff]
  %v355 = vld [vmem:[%s4 + $0x150] sm:$0xff]
  %v356 = vld [vmem:[%s4 + $0x158] sm:$0xff]
  %v357 = vld [vmem:[%s4 + $0x160] sm:$0xff]
  %v358 = vld [vmem:[%s4 + $0x168] sm:$0xff]
  %v359 = vld [vmem:[%s4 + $0x170] sm:$0xff]
  %v360 = vld [vmem:[%s4 + $0x178] sm:$0xff]
  %v361 = vld [vmem:[%s4 + $0x180] sm:$0xff]
  %v362 = vld [vmem:[%s4 + $0x188] sm:$0xff]
  %v363 = vld [vmem:[%s4 + $0x190] sm:$0xff]
  %v364 = vld [vmem:[%s4 + $0x198] sm:$0xff]
  %v365 = vld [vmem:[%s4 + $0x1a0] sm:$0xff]
  %v366 = vld [vmem:[%s4 + $0x1a8] sm:$0xff]
  %v367 = vld [vmem:[%s4 + $0x1b0] sm:$0xff]
  %v368 = vld [vmem:[%s4 + $0x1b8] sm:$0xff]
  %v369 = vld [vmem:[%s4 + $0x1c0] sm:$0xff]
  %v370 = vld [vmem:[%s4 + $0x1c8] sm:$0xff]
  %v371 = vld [vmem:[%s4 + $0x1d0] sm:$0xff]
  %v372 = vld [vmem:[%s4 + $0x1d8] sm:$0xff]
  %v373 = vld [vmem:[%s4 + $0x1e0] sm:$0xff]
  %v374 = vld [vmem:[%s4 + $0x1e8] sm:$0xff]
  %v375 = vld [vmem:[%s4 + $0x1f0] sm:$0xff]
  %v376 = vld [vmem:[%s4 + $0x1f8] sm:$0xff]
  %s377 = smul.u32 0, 4
  %s378 = smul.addr %s377, 8
  %s379 = scalar_lea.vmem [#allocation2], %s378
  %v380 = vld [vmem:[%s379] sm:$0xff]
  %v381 = vld [vmem:[%s379 + $0x8] sm:$0xff]
  %v382 = vld [vmem:[%s379 + $0x10] sm:$0xff]
  %v383 = vld [vmem:[%s379 + $0x18] sm:$0xff]
  %384 = vmatpush.msra.mxu0 %v373
  %385 = vmatpush.msra.mxu0 %v369
  %386 = vmatpush.msra.mxu0 %v365
  %387 = vmatpush.msra.mxu0 %v361
  %388 = vmatpush.msra.mxu0 %v357
  %389 = vmatpush.msra.mxu0 %v353
  %390 = vmatpush.msra.mxu0 %v349
  %391 = vmatpush.msra.mxu0 %v345
  %392 = vmatpush.msra.mxu0 %v341
  %393 = vmatpush.msra.mxu0 %v337
  %394 = vmatpush.msra.mxu0 %v333
  %395 = vmatpush.msra.mxu0 %v329
  %396 = vmatpush.msra.mxu0 %v325
  %397 = vmatpush.msra.mxu0 %v321
  %398 = vmatpush.msra.mxu0 %v317
  %399 = vmatpush.msra.mxu0 %v313
  %400 = vmatmul.f32.gmra.mxu0 0.0
  %v401 = vpop.f32.mrf.mxu0
  %v402 = vadd.f32 %v380, %v401
  %403 = vdwg.mxu0
  %404 = vmatpush.msra.mxu0 %v374
  %405 = vmatpush.msra.mxu0 %v370
  %406 = vmatpush.msra.mxu0 %v366
  %407 = vmatpush.msra.mxu0 %v362
  %408 = vmatpush.msra.mxu0 %v358
  %409 = vmatpush.msra.mxu0 %v354
  %410 = vmatpush.msra.mxu0 %v350
  %411 = vmatpush.msra.mxu0 %v346
  %412 = vmatpush.msra.mxu0 %v342
  %413 = vmatpush.msra.mxu0 %v338
  %414 = vmatpush.msra.mxu0 %v334
  %415 = vmatpush.msra.mxu0 %v330
  %416 = vmatpush.msra.mxu0 %v326
  %417 = vmatpush.msra.mxu0 %v322
  %418 = vmatpush.msra.mxu0 %v318
  %419 = vmatpush.msra.mxu0 %v314
  %420 = vmatmul.f32.gmra.mxu0 0.0
  %v421 = vpop.f32.mrf.mxu0
  %v422 = vadd.f32 %v381, %v421
  %423 = vdwg.mxu0
  %424 = vmatpush.msra.mxu0 %v375
  %425 = vmatpush.msra.mxu0 %v371
  %426 = vmatpush.msra.mxu0 %v367
  %427 = vmatpush.msra.mxu0 %v363
  %428 = vmatpush.msra.mxu0 %v359
  %429 = vmatpush.msra.mxu0 %v355
  %430 = vmatpush.msra.mxu0 %v351
  %431 = vmatpush.msra.mxu0 %v347
  %432 = vmatpush.msra.mxu0 %v343
  %433 = vmatpush.msra.mxu0 %v339
  %434 = vmatpush.msra.mxu0 %v335
  %435 = vmatpush.msra.mxu0 %v331
  %436 = vmatpush.msra.mxu0 %v327
  %437 = vmatpush.msra.mxu0 %v323
  %438 = vmatpush.msra.mxu0 %v319
  %439 = vmatpush.msra.mxu0 %v315
  %440 = vmatmul.f32.gmra.mxu0 0.0
  %v441 = vpop.f32.mrf.mxu0
  %v442 = vadd.f32 %v382, %v441
  %443 = vdwg.mxu0
  %444 = vmatpush.msra.mxu0 %v376
  %445 = vmatpush.msra.mxu0 %v372
  %446 = vmatpush.msra.mxu0 %v368
  %447 = vmatpush.msra.mxu0 %v364
  %448 = vmatpush.msra.mxu0 %v360
  %449 = vmatpush.msra.mxu0 %v356
  %450 = vmatpush.msra.mxu0 %v352
  %451 = vmatpush.msra.mxu0 %v348
  %452 = vmatpush.msra.mxu0 %v344
  %453 = vmatpush.msra.mxu0 %v340
  %454 = vmatpush.msra.mxu0 %v336
  %455 = vmatpush.msra.mxu0 %v332
  %456 = vmatpush.msra.mxu0 %v328
  %457 = vmatpush.msra.mxu0 %v324
  %458 = vmatpush.msra.mxu0 %v320
  %459 = vmatpush.msra.mxu0 %v316
  %460 = vmatmul.f32.gmra.mxu0 0.0
  %v461 = vpop.f32.mrf.mxu0
  %v462 = vadd.f32 %v383, %v461
  %463 = vdwg.mxu0
  %v464 = vsub.f32 0.0, %v402
  %v465 = vmul.f32 %v464, 1.442695
  %v466 = vpow.pop %v465
  %v467 = vadd.f32 %v466, 1.0
  %v468 = vrcp.pop %v467
  %v469 = vmul.f32 %v467, %v468
  %v470 = vsub.f32 1.0, %v469
  %v471 = vmul.f32 %v468, %v470
  %v472 = vadd.f32 %v468, %v471
  %vm473 = vweird.f32 %v467
  %vm474 = vweird.f32 %v468
  %vm475 = vmor %vm473, %vm474
  %v476 = vsel %vm475, %v468, %v472
  %v477 = vand.u32 2147483647, %v467
  %vm478 = vcmp.eq.f32.partialorder %v477, 8.507059e+37
  %v479 = vand.u32 %v467, 2147483648
  %v480 = vor.u32 1.1754944e-38, %v479
  %v481 = vsel %vm478, %v480, %v476
  %v482 = vmul.f32 1.0, %v481
  %v483 = vsub.f32 0.0, %v422
  %v484 = vmul.f32 %v483, 1.442695
  %v485 = vpow.pop %v484
  %v486 = vadd.f32 %v485, 1.0
  %v487 = vrcp.pop %v486
  %v488 = vmul.f32 %v486, %v487
  %v489 = vsub.f32 1.0, %v488
  %v490 = vmul.f32 %v487, %v489
  %v491 = vadd.f32 %v487, %v490
  %vm492 = vweird.f32 %v486
  %vm493 = vweird.f32 %v487
  %vm494 = vmor %vm492, %vm493
  %v495 = vsel %vm494, %v487, %v491
  %v496 = vand.u32 2147483647, %v486
  %vm497 = vcmp.eq.f32.partialorder %v496, 8.507059e+37
  %v498 = vand.u32 %v486, 2147483648
  %v499 = vor.u32 1.1754944e-38, %v498
  %v500 = vsel %vm497, %v499, %v495
  %v501 = vmul.f32 1.0, %v500
  %v502 = vtanh.pop %v442
  %v503 = vsub.f32 0.0, %v462
  %v504 = vmul.f32 %v503, 1.442695
  %v505 = vpow.pop %v504
  %v506 = vadd.f32 %v505, 1.0
  %v507 = vrcp.pop %v506
  %v508 = vmul.f32 %v506, %v507
  %v509 = vsub.f32 1.0, %v508
  %v510 = vmul.f32 %v507, %v509
  %v511 = vadd.f32 %v507, %v510
  %vm512 = vweird.f32 %v506
  %vm513 = vweird.f32 %v507
  %vm514 = vmor %vm512, %vm513
  %v515 = vsel %vm514, %v507, %v511
  %v516 = vand.u32 2147483647, %v506
  %vm517 = vcmp.eq.f32.partialorder %v516, 8.507059e+37
  %v518 = vand.u32 %v506, 2147483648
  %v519 = vor.u32 1.1754944e-38, %v518
  %v520 = vsel %vm517, %v519, %v515
  %v521 = vmul.f32 1.0, %v520
  %v522 = vmul.f32 %v501, 0.0
  %v523 = vmul.f32 %v482, %v502
  %v524 = vadd.f32 %v522, %v523
  %v525 = vtanh.pop %v524
  %v526 = vmul.f32 %v521, %v525
  %s527 = smul.u32 1, 4
  %s528 = smul.addr %s527, 8
  %s529 = scalar_lea.vmem [#allocation2], %s528
  %v530 = vld [vmem:[%s529] sm:$0xff]
  %v531 = vld [vmem:[%s529 + $0x8] sm:$0xff]
  %v532 = vld [vmem:[%s529 + $0x10] sm:$0xff]
  %v533 = vld [vmem:[%s529 + $0x18] sm:$0xff]
  %534 = vmatpush.msra.mxu0 %v373
  %535 = vmatpush.msra.mxu0 %v369
  %536 = vmatpush.msra.mxu0 %v365
  %537 = vmatpush.msra.mxu0 %v361
  %538 = vmatpush.msra.mxu0 %v357
  %539 = vmatpush.msra.mxu0 %v353
  %540 = vmatpush.msra.mxu0 %v349
  %541 = vmatpush.msra.mxu0 %v345
  %542 = vmatpush.msra.mxu0 %v341
  %543 = vmatpush.msra.mxu0 %v337
  %544 = vmatpush.msra.mxu0 %v333
  %545 = vmatpush.msra.mxu0 %v329
  %546 = vmatpush.msra.mxu0 %v325
  %547 = vmatpush.msra.mxu0 %v321
  %548 = vmatpush.msra.mxu0 %v317
  %549 = vmatpush.msra.mxu0 %v313
  %550 = vmatmul.f32.gmra.mxu0 %v526
  %v551 = vpop.f32.mrf.mxu0
  %v552 = vadd.f32 %v530, %v551
  %553 = vdwg.mxu0
  %554 = vmatpush.msra.mxu0 %v374
  %555 = vmatpush.msra.mxu0 %v370
  %556 = vmatpush.msra.mxu0 %v366
  %557 = vmatpush.msra.mxu0 %v362
  %558 = vmatpush.msra.mxu0 %v358
  %559 = vmatpush.msra.mxu0 %v354
  %560 = vmatpush.msra.mxu0 %v350
  %561 = vmatpush.msra.mxu0 %v346
  %562 = vmatpush.msra.mxu0 %v342
  %563 = vmatpush.msra.mxu0 %v338
  %564 = vmatpush.msra.mxu0 %v334
  %565 = vmatpush.msra.mxu0 %v330
  %566 = vmatpush.msra.mxu0 %v326
  %567 = vmatpush.msra.mxu0 %v322
  %568 = vmatpush.msra.mxu0 %v318
  %569 = vmatpush.msra.mxu0 %v314
  %570 = vmatmul.f32.gmra.mxu0 %v526
  %v571 = vpop.f32.mrf.mxu0
  %v572 = vadd.f32 %v531, %v571
  %573 = vdwg.mxu0
  %574 = vmatpush.msra.mxu0 %v375
  %575 = vmatpush.msra.mxu0 %v371
  %576 = vmatpush.msra.mxu0 %v367
  %577 = vmatpush.msra.mxu0 %v363
  %578 = vmatpush.msra.mxu0 %v359
  %579 = vmatpush.msra.mxu0 %v355
  %580 = vmatpush.msra.mxu0 %v351
  %581 = vmatpush.msra.mxu0 %v347
  %582 = vmatpush.msra.mxu0 %v343
  %583 = vmatpush.msra.mxu0 %v339
  %584 = vmatpush.msra.mxu0 %v335
  %585 = vmatpush.msra.mxu0 %v331
  %586 = vmatpush.msra.mxu0 %v327
  %587 = vmatpush.msra.mxu0 %v323
  %588 = vmatpush.msra.mxu0 %v319
  %589 = vmatpush.msra.mxu0 %v315
  %590 = vmatmul.f32.gmra.mxu0 %v526
  %v591 = vpop.f32.mrf.mxu0
  %v592 = vadd.f32 %v532, %v591
  %593 = vdwg.mxu0
  %594 = vmatpush.msra.mxu0 %v376
  %595 = vmatpush.msra.mxu0 %v372
  %596 = vmatpush.msra.mxu0 %v368
  %597 = vmatpush.msra.mxu0 %v364
  %598 = vmatpush.msra.mxu0 %v360
  %599 = vmatpush.msra.mxu0 %v356
  %600 = vmatpush.msra.mxu0 %v352
  %601 = vmatpush.msra.mxu0 %v348
  %602 = vmatpush.msra.mxu0 %v344
  %603 = vmatpush.msra.mxu0 %v340
  %604 = vmatpush.msra.mxu0 %v336
  %605 = vmatpush.msra.mxu0 %v332
  %606 = vmatpush.msra.mxu0 %v328
  %607 = vmatpush.msra.mxu0 %v324
  %608 = vmatpush.msra.mxu0 %v320
  %609 = vmatpush.msra.mxu0 %v316
  %610 = vmatmul.f32.gmra.mxu0 %v526
  %v611 = vpop.f32.mrf.mxu0
  %v612 = vadd.f32 %v533, %v611
  %613 = vdwg.mxu0
  %v614 = vsub.f32 0.0, %v552
  %v615 = vmul.f32 %v614, 1.442695
  %v616 = vpow.pop %v615
  %v617 = vadd.f32 %v616, 1.0
  %v618 = vrcp.pop %v617
  %v619 = vmul.f32 %v617, %v618
  %v620 = vsub.f32 1.0, %v619
  %v621 = vmul.f32 %v618, %v620
  %v622 = vadd.f32 %v618, %v621
  %vm623 = vweird.f32 %v617
  %vm624 = vweird.f32 %v618
  %vm625 = vmor %vm623, %vm624
  %v626 = vsel %vm625, %v618, %v622
  %v627 = vand.u32 2147483647, %v617
  %vm628 = vcmp.eq.f32.partialorder %v627, 8.507059e+37
  %v629 = vand.u32 %v617, 2147483648
  %v630 = vor.u32 1.1754944e-38, %v629
  %v631 = vsel %vm628, %v630, %v626
  %v632 = vmul.f32 1.0, %v631
  %v633 = vsub.f32 0.0, %v572
  %v634 = vmul.f32 %v633, 1.442695
  %v635 = vpow.pop %v634
  %v636 = vadd.f32 %v635, 1.0
  %v637 = vrcp.pop %v636
  %v638 = vmul.f32 %v636, %v637
  %v639 = vsub.f32 1.0, %v638
  %v640 = vmul.f32 %v637, %v639
  %v641 = vadd.f32 %v637, %v640
  %vm642 = vweird.f32 %v636
  %vm643 = vweird.f32 %v637
  %vm644 = vmor %vm642, %vm643
  %v645 = vsel %vm644, %v637, %v641
  %v646 = vand.u32 2147483647, %v636
  %vm647 = vcmp.eq.f32.partialorder %v646, 8.507059e+37
  %v648 = vand.u32 %v636, 2147483648
  %v649 = vor.u32 1.1754944e-38, %v648
  %v650 = vsel %vm647, %v649, %v645
  %v651 = vmul.f32 1.0, %v650
  %v652 = vtanh.pop %v592
  %v653 = vsub.f32 0.0, %v612
  %v654 = vmul.f32 %v653, 1.442695
  %v655 = vpow.pop %v654
  %v656 = vadd.f32 %v655, 1.0
  %v657 = vrcp.pop %v656
  %v658 = vmul.f32 %v656, %v657
  %v659 = vsub.f32 1.0, %v658
  %v660 = vmul.f32 %v657, %v659
  %v661 = vadd.f32 %v657, %v660
  %vm662 = vweird.f32 %v656
  %vm663 = vweird.f32 %v657
  %vm664 = vmor %vm662, %vm663
  %v665 = vsel %vm664, %v657, %v661
  %v666 = vand.u32 2147483647, %v656
  %vm667 = vcmp.eq.f32.partialorder %v666, 8.507059e+37
  %v668 = vand.u32 %v656, 2147483648
  %v669 = vor.u32 1.1754944e-38, %v668
  %v670 = vsel %vm667, %v669, %v665
  %v671 = vmul.f32 1.0, %v670
  %v672 = vmul.f32 %v651, %v524
  %v673 = vmul.f32 %v632, %v652
  %v674 = vadd.f32 %v672, %v673
  %v675 = vtanh.pop %v674
  %v676 = vmul.f32 %v671, %v675
  %s677 = smul.u32 2, 4
  %s678 = smul.addr %s677, 8
  %s679 = scalar_lea.vmem [#allocation2], %s678
  %v680 = vld [vmem:[%s679] sm:$0xff]
  %v681 = vld [vmem:[%s679 + $0x8] sm:$0xff]
  %v682 = vld [vmem:[%s679 + $0x10] sm:$0xff]
  %v683 = vld [vmem:[%s679 + $0x18] sm:$0xff]
  %684 = vmatpush.msra.mxu0 %v373
  %685 = vmatpush.msra.mxu0 %v369
  %686 = vmatpush.msra.mxu0 %v365
  %687 = vmatpush.msra.mxu0 %v361
  %688 = vmatpush.msra.mxu0 %v357
  %689 = vmatpush.msra.mxu0 %v353
  %690 = vmatpush.msra.mxu0 %v349
  %691 = vmatpush.msra.mxu0 %v345
  %692 = vmatpush.msra.mxu0 %v341
  %693 = vmatpush.msra.mxu0 %v337
  %694 = vmatpush.msra.mxu0 %v333
  %695 = vmatpush.msra.mxu0 %v329
  %696 = vmatpush.msra.mxu0 %v325
  %697 = vmatpush.msra.mxu0 %v321
  %698 = vmatpush.msra.mxu0 %v317
  %699 = vmatpush.msra.mxu0 %v313
  %700 = vmatmul.f32.gmra.mxu0 %v676
  %v701 = vpop.f32.mrf.mxu0
  %v702 = vadd.f32 %v680, %v701
  %703 = vdwg.mxu0
  %704 = vmatpush.msra.mxu0 %v374
  %705 = vmatpush.msra.mxu0 %v370
  %706 = vmatpush.msra.mxu0 %v366
  %707 = vmatpush.msra.mxu0 %v362
  %708 = vmatpush.msra.mxu0 %v358
  %709 = vmatpush.msra.mxu0 %v354
  %710 = vmatpush.msra.mxu0 %v350
  %711 = vmatpush.msra.mxu0 %v346
  %712 = vmatpush.msra.mxu0 %v342
  %713 = vmatpush.msra.mxu0 %v338
  %714 = vmatpush.msra.mxu0 %v334
  %715 = vmatpush.msra.mxu0 %v330
  %716 = vmatpush.msra.mxu0 %v326
  %717 = vmatpush.msra.mxu0 %v322
  %718 = vmatpush.msra.mxu0 %v318
  %719 = vmatpush.msra.mxu0 %v314
  %720 = vmatmul.f32.gmra.mxu0 %v676
  %v721 = vpop.f32.mrf.mxu0
  %v722 = vadd.f32 %v681, %v721
  %723 = vdwg.mxu0
  %724 = vmatpush.msra.mxu0 %v375
  %725 = vmatpush.msra.mxu0 %v371
  %726 = vmatpush.msra.mxu0 %v367
  %727 = vmatpush.msra.mxu0 %v363
  %728 = vmatpush.msra.mxu0 %v359
  %729 = vmatpush.msra.mxu0 %v355
  %730 = vmatpush.msra.mxu0 %v351
  %731 = vmatpush.msra.mxu0 %v347
  %732 = vmatpush.msra.mxu0 %v343
  %733 = vmatpush.msra.mxu0 %v339
  %734 = vmatpush.msra.mxu0 %v335
  %735 = vmatpush.msra.mxu0 %v331
  %736 = vmatpush.msra.mxu0 %v327
  %737 = vmatpush.msra.mxu0 %v323
  %738 = vmatpush.msra.mxu0 %v319
  %739 = vmatpush.msra.mxu0 %v315
  %740 = vmatmul.f32.gmra.mxu0 %v676
  %v741 = vpop.f32.mrf.mxu0
  %v742 = vadd.f32 %v682, %v741
  %743 = vdwg.mxu0
  %744 = vmatpush.msra.mxu0 %v376
  %745 = vmatpush.msra.mxu0 %v372
  %746 = vmatpush.msra.mxu0 %v368
  %747 = vmatpush.msra.mxu0 %v364
  %748 = vmatpush.msra.mxu0 %v360
  %749 = vmatpush.msra.mxu0 %v356
  %750 = vmatpush.msra.mxu0 %v352
  %751 = vmatpush.msra.mxu0 %v348
  %752 = vmatpush.msra.mxu0 %v344
  %753 = vmatpush.msra.mxu0 %v340
  %754 = vmatpush.msra.mxu0 %v336
  %755 = vmatpush.msra.mxu0 %v332
  %756 = vmatpush.msra.mxu0 %v328
  %757 = vmatpush.msra.mxu0 %v324
  %758 = vmatpush.msra.mxu0 %v320
  %759 = vmatpush.msra.mxu0 %v316
  %760 = vmatmul.f32.gmra.mxu0 %v676
  %v761 = vpop.f32.mrf.mxu0
  %v762 = vadd.f32 %v683, %v761
  %763 = vdwg.mxu0
  %v764 = vsub.f32 0.0, %v702
  %v765 = vmul.f32 %v764, 1.442695
  %v766 = vpow.pop %v765
  %v767 = vadd.f32 %v766, 1.0
  %v768 = vrcp.pop %v767
  %v769 = vmul.f32 %v767, %v768
  %v770 = vsub.f32 1.0, %v769
  %v771 = vmul.f32 %v768, %v770
  %v772 = vadd.f32 %v768, %v771
  %vm773 = vweird.f32 %v767
  %vm774 = vweird.f32 %v768
  %vm775 = vmor %vm773, %vm774
  %v776 = vsel %vm775, %v768, %v772
  %v777 = vand.u32 2147483647, %v767
  %vm778 = vcmp.eq.f32.partialorder %v777, 8.507059e+37
  %v779 = vand.u32 %v767, 2147483648
  %v780 = vor.u32 1.1754944e-38, %v779
  %v781 = vsel %vm778, %v780, %v776
  %v782 = vmul.f32 1.0, %v781
  %v783 = vsub.f32 0.0, %v722
  %v784 = vmul.f32 %v783, 1.442695
  %v785 = vpow.pop %v784
  %v786 = vadd.f32 %v785, 1.0
  %v787 = vrcp.pop %v786
  %v788 = vmul.f32 %v786, %v787
  %v789 = vsub.f32 1.0, %v788
  %v790 = vmul.f32 %v787, %v789
  %v791 = vadd.f32 %v787, %v790
  %vm792 = vweird.f32 %v786
  %vm793 = vweird.f32 %v787
  %vm794 = vmor %vm792, %vm793
  %v795 = vsel %vm794, %v787, %v791
  %v796 = vand.u32 2147483647, %v786
  %vm797 = vcmp.eq.f32.partialorder %v796, 8.507059e+37
  %v798 = vand.u32 %v786, 2147483648
  %v799 = vor.u32 1.1754944e-38, %v798
  %v800 = vsel %vm797, %v799, %v795
  %v801 = vmul.f32 1.0, %v800
  %v802 = vtanh.pop %v742
  %v803 = vsub.f32 0.0, %v762
  %v804 = vmul.f32 %v803, 1.442695
  %v805 = vpow.pop %v804
  %v806 = vadd.f32 %v805, 1.0
  %v807 = vrcp.pop %v806
  %v808 = vmul.f32 %v806, %v807
  %v809 = vsub.f32 1.0, %v808
  %v810 = vmul.f32 %v807, %v809
  %v811 = vadd.f32 %v807, %v810
  %vm812 = vweird.f32 %v806
  %vm813 = vweird.f32 %v807
  %vm814 = vmor %vm812, %vm813
  %v815 = vsel %vm814, %v807, %v811
  %v816 = vand.u32 2147483647, %v806
  %vm817 = vcmp.eq.f32.partialorder %v816, 8.507059e+37
  %v818 = vand.u32 %v806, 2147483648
  %v819 = vor.u32 1.1754944e-38, %v818
  %v820 = vsel %vm817, %v819, %v815
  %v821 = vmul.f32 1.0, %v820
  %v822 = vmul.f32 %v801, %v674
  %v823 = vmul.f32 %v782, %v802
  %v824 = vadd.f32 %v822, %v823
  %v825 = vtanh.pop %v824
  %v826 = vmul.f32 %v821, %v825
  %s827 = smul.u32 3, 4
  %s828 = smul.addr %s827, 8
  %s829 = scalar_lea.vmem [#allocation2], %s828
  %v830 = vld [vmem:[%s829] sm:$0xff]
  %v831 = vld [vmem:[%s829 + $0x8] sm:$0xff]
  %v832 = vld [vmem:[%s829 + $0x10] sm:$0xff]
  %v833 = vld [vmem:[%s829 + $0x18] sm:$0xff]
  %834 = vmatpush.msra.mxu0 %v373
  %835 = vmatpush.msra.mxu0 %v369
  %836 = vmatpush.msra.mxu0 %v365
  %837 = vmatpush.msra.mxu0 %v361
  %838 = vmatpush.msra.mxu0 %v357
  %839 = vmatpush.msra.mxu0 %v353
  %840 = vmatpush.msra.mxu0 %v349
  %841 = vmatpush.msra.mxu0 %v345
  %842 = vmatpush.msra.mxu0 %v341
  %843 = vmatpush.msra.mxu0 %v337
  %844 = vmatpush.msra.mxu0 %v333
  %845 = vmatpush.msra.mxu0 %v329
  %846 = vmatpush.msra.mxu0 %v325
  %847 = vmatpush.msra.mxu0 %v321
  %848 = vmatpush.msra.mxu0 %v317
  %849 = vmatpush.msra.mxu0 %v313
  %850 = vmatmul.f32.gmra.mxu0 %v826
  %v851 = vpop.f32.mrf.mxu0
  %v852 = vadd.f32 %v830, %v851
  %853 = vdwg.mxu0
  %854 = vmatpush.msra.mxu0 %v374
  %855 = vmatpush.msra.mxu0 %v370
  %856 = vmatpush.msra.mxu0 %v366
  %857 = vmatpush.msra.mxu0 %v362
  %858 = vmatpush.msra.mxu0 %v358
  %859 = vmatpush.msra.mxu0 %v354
  %860 = vmatpush.msra.mxu0 %v350
  %861 = vmatpush.msra.mxu0 %v346
  %862 = vmatpush.msra.mxu0 %v342
  %863 = vmatpush.msra.mxu0 %v338
  %864 = vmatpush.msra.mxu0 %v334
  %865 = vmatpush.msra.mxu0 %v330
  %866 = vmatpush.msra.mxu0 %v326
  %867 = vmatpush.msra.mxu0 %v322
  %868 = vmatpush.msra.mxu0 %v318
  %869 = vmatpush.msra.mxu0 %v314
  %870 = vmatmul.f32.gmra.mxu0 %v826
  %v871 = vpop.f32.mrf.mxu0
  %v872 = vadd.f32 %v831, %v871
  %873 = vdwg.mxu0
  %874 = vmatpush.msra.mxu0 %v375
  %875 = vmatpush.msra.mxu0 %v371
  %876 = vmatpush.msra.mxu0 %v367
  %877 = vmatpush.msra.mxu0 %v363
  %878 = vmatpush.msra.mxu0 %v359
  %879 = vmatpush.msra.mxu0 %v355
  %880 = vmatpush.msra.mxu0 %v351
  %881 = vmatpush.msra.mxu0 %v347
  %882 = vmatpush.msra.mxu0 %v343
  %883 = vmatpush.msra.mxu0 %v339
  %884 = vmatpush.msra.mxu0 %v335
  %885 = vmatpush.msra.mxu0 %v331
  %886 = vmatpush.msra.mxu0 %v327
  %887 = vmatpush.msra.mxu0 %v323
  %888 = vmatpush.msra.mxu0 %v319
  %889 = vmatpush.msra.mxu0 %v315
  %890 = vmatmul.f32.gmra.mxu0 %v826
  %v891 = vpop.f32.mrf.mxu0
  %v892 = vadd.f32 %v832, %v891
  %893 = vdwg.mxu0
  %894 = vmatpush.msra.mxu0 %v376
  %895 = vmatpush.msra.mxu0 %v372
  %896 = vmatpush.msra.mxu0 %v368
  %897 = vmatpush.msra.mxu0 %v364
  %898 = vmatpush.msra.mxu0 %v360
  %899 = vmatpush.msra.mxu0 %v356
  %900 = vmatpush.msra.mxu0 %v352
  %901 = vmatpush.msra.mxu0 %v348
  %902 = vmatpush.msra.mxu0 %v344
  %903 = vmatpush.msra.mxu0 %v340
  %904 = vmatpush.msra.mxu0 %v336
  %905 = vmatpush.msra.mxu0 %v332
  %906 = vmatpush.msra.mxu0 %v328
  %907 = vmatpush.msra.mxu0 %v324
  %908 = vmatpush.msra.mxu0 %v320
  %909 = vmatpush.msra.mxu0 %v316
  %910 = vmatmul.f32.gmra.mxu0 %v826
  %v911 = vpop.f32.mrf.mxu0
  %v912 = vadd.f32 %v833, %v911
  %913 = vdwg.mxu0
  %v914 = vsub.f32 0.0, %v852
  %v915 = vmul.f32 %v914, 1.442695
  %v916 = vpow.pop %v915
  %v917 = vadd.f32 %v916, 1.0
  %v918 = vrcp.pop %v917
  %v919 = vmul.f32 %v917, %v918
  %v920 = vsub.f32 1.0, %v919
  %v921 = vmul.f32 %v918, %v920
  %v922 = vadd.f32 %v918, %v921
  %vm923 = vweird.f32 %v917
  %vm924 = vweird.f32 %v918
  %vm925 = vmor %vm923, %vm924
  %v926 = vsel %vm925, %v918, %v922
  %v927 = vand.u32 2147483647, %v917
  %vm928 = vcmp.eq.f32.partialorder %v927, 8.507059e+37
  %v929 = vand.u32 %v917, 2147483648
  %v930 = vor.u32 1.1754944e-38, %v929
  %v931 = vsel %vm928, %v930, %v926
  %v932 = vmul.f32 1.0, %v931
  %v933 = vsub.f32 0.0, %v872
  %v934 = vmul.f32 %v933, 1.442695
  %v935 = vpow.pop %v934
  %v936 = vadd.f32 %v935, 1.0
  %v937 = vrcp.pop %v936
  %v938 = vmul.f32 %v936, %v937
  %v939 = vsub.f32 1.0, %v938
  %v940 = vmul.f32 %v937, %v939
  %v941 = vadd.f32 %v937, %v940
  %vm942 = vweird.f32 %v936
  %vm943 = vweird.f32 %v937
  %vm944 = vmor %vm942, %vm943
  %v945 = vsel %vm944, %v937, %v941
  %v946 = vand.u32 2147483647, %v936
  %vm947 = vcmp.eq.f32.partialorder %v946, 8.507059e+37
  %v948 = vand.u32 %v936, 2147483648
  %v949 = vor.u32 1.1754944e-38, %v948
  %v950 = vsel %vm947, %v949, %v945
  %v951 = vmul.f32 1.0, %v950
  %v952 = vtanh.pop %v892
  %v953 = vsub.f32 0.0, %v912
  %v954 = vmul.f32 %v953, 1.442695
  %v955 = vpow.pop %v954
  %v956 = vadd.f32 %v955, 1.0
  %v957 = vrcp.pop %v956
  %v958 = vmul.f32 %v956, %v957
  %v959 = vsub.f32 1.0, %v958
  %v960 = vmul.f32 %v957, %v959
  %v961 = vadd.f32 %v957, %v960
  %vm962 = vweird.f32 %v956
  %vm963 = vweird.f32 %v957
  %vm964 = vmor %vm962, %vm963
  %v965 = vsel %vm964, %v957, %v961
  %v966 = vand.u32 2147483647, %v956
  %vm967 = vcmp.eq.f32.partialorder %v966, 8.507059e+37
  %v968 = vand.u32 %v956, 2147483648
  %v969 = vor.u32 1.1754944e-38, %v968
  %v970 = vsel %vm967, %v969, %v965
  %v971 = vmul.f32 1.0, %v970
  %v972 = vmul.f32 %v951, %v824
  %v973 = vmul.f32 %v932, %v952
  %v974 = vadd.f32 %v972, %v973
  %v975 = vtanh.pop %v974
  %v976 = vmul.f32 %v971, %v975
  %s977 = smul.u32 4, 4
  %s978 = smul.addr %s977, 8
  %s979 = scalar_lea.vmem [#allocation2], %s978
  %v980 = vld [vmem:[%s979] sm:$0xff]
  %v981 = vld [vmem:[%s979 + $0x8] sm:$0xff]
  %v982 = vld [vmem:[%s979 + $0x10] sm:$0xff]
  %v983 = vld [vmem:[%s979 + $0x18] sm:$0xff]
  %984 = vmatpush.msra.mxu0 %v373
  %985 = vmatpush.msra.mxu0 %v369
  %986 = vmatpush.msra.mxu0 %v365
  %987 = vmatpush.msra.mxu0 %v361
  %988 = vmatpush.msra.mxu0 %v357
  %989 = vmatpush.msra.mxu0 %v353
  %990 = vmatpush.msra.mxu0 %v349
  %991 = vmatpush.msra.mxu0 %v345
  %992 = vmatpush.msra.mxu0 %v341
  %993 = vmatpush.msra.mxu0 %v337
  %994 = vmatpush.msra.mxu0 %v333
  %995 = vmatpush.msra.mxu0 %v329
  %996 = vmatpush.msra.mxu0 %v325
  %997 = vmatpush.msra.mxu0 %v321
  %998 = vmatpush.msra.mxu0 %v317
  %999 = vmatpush.msra.mxu0 %v313
  %1000 = vmatmul.f32.gmra.mxu0 %v976
  %v1001 = vpop.f32.mrf.mxu0
  %v1002 = vadd.f32 %v980, %v1001
  %1003 = vdwg.mxu0
  %1004 = vmatpush.msra.mxu0 %v374
  %1005 = vmatpush.msra.mxu0 %v370
  %1006 = vmatpush.msra.mxu0 %v366
  %1007 = vmatpush.msra.mxu0 %v362
  %1008 = vmatpush.msra.mxu0 %v358
  %1009 = vmatpush.msra.mxu0 %v354
  %1010 = vmatpush.msra.mxu0 %v350
  %1011 = vmatpush.msra.mxu0 %v346
  %1012 = vmatpush.msra.mxu0 %v342
  %1013 = vmatpush.msra.mxu0 %v338
  %1014 = vmatpush.msra.mxu0 %v334
  %1015 = vmatpush.msra.mxu0 %v330
  %1016 = vmatpush.msra.mxu0 %v326
  %1017 = vmatpush.msra.mxu0 %v322
  %1018 = vmatpush.msra.mxu0 %v318
  %1019 = vmatpush.msra.mxu0 %v314
  %1020 = vmatmul.f32.gmra.mxu0 %v976
  %v1021 = vpop.f32.mrf.mxu0
  %v1022 = vadd.f32 %v981, %v1021
  %1023 = vdwg.mxu0
  %1024 = vmatpush.msra.mxu0 %v375
  %1025 = vmatpush.msra.mxu0 %v371
  %1026 = vmatpush.msra.mxu0 %v367
  %1027 = vmatpush.msra.mxu0 %v363
  %1028 = vmatpush.msra.mxu0 %v359
  %1029 = vmatpush.msra.mxu0 %v355
  %1030 = vmatpush.msra.mxu0 %v351
  %1031 = vmatpush.msra.mxu0 %v347
  %1032 = vmatpush.msra.mxu0 %v343
  %1033 = vmatpush.msra.mxu0 %v339
  %1034 = vmatpush.msra.mxu0 %v335
  %1035 = vmatpush.msra.mxu0 %v331
  %1036 = vmatpush.msra.mxu0 %v327
  %1037 = vmatpush.msra.mxu0 %v323
  %1038 = vmatpush.msra.mxu0 %v319
  %1039 = vmatpush.msra.mxu0 %v315
  %1040 = vmatmul.f32.gmra.mxu0 %v976
  %v1041 = vpop.f32.mrf.mxu0
  %v1042 = vadd.f32 %v982, %v1041
  %1043 = vdwg.mxu0
  %1044 = vmatpush.msra.mxu0 %v376
  %1045 = vmatpush.msra.mxu0 %v372
  %1046 = vmatpush.msra.mxu0 %v368
  %1047 = vmatpush.msra.mxu0 %v364
  %1048 = vmatpush.msra.mxu0 %v360
  %1049 = vmatpush.msra.mxu0 %v356
  %1050 = vmatpush.msra.mxu0 %v352
  %1051 = vmatpush.msra.mxu0 %v348
  %1052 = vmatpush.msra.mxu0 %v344
  %1053 = vmatpush.msra.mxu0 %v340
  %1054 = vmatpush.msra.mxu0 %v336
  %1055 = vmatpush.msra.mxu0 %v332
  %1056 = vmatpush.msra.mxu0 %v328
  %1057 = vmatpush.msra.mxu0 %v324
  %1058 = vmatpush.msra.mxu0 %v320
  %1059 = vmatpush.msra.mxu0 %v316
  %1060 = vmatmul.f32.gmra.mxu0 %v976
  %v1061 = vpop.f32.mrf.mxu0
  %v1062 = vadd.f32 %v983, %v1061
  %1063 = vdwg.mxu0
  %v1064 = vsub.f32 0.0, %v1002
  %v1065 = vmul.f32 %v1064, 1.442695
  %v1066 = vpow.pop %v1065
  %v1067 = vadd.f32 %v1066, 1.0
  %v1068 = vrcp.pop %v1067
  %v1069 = vmul.f32 %v1067, %v1068
  %v1070 = vsub.f32 1.0, %v1069
  %v1071 = vmul.f32 %v1068, %v1070
  %v1072 = vadd.f32 %v1068, %v1071
  %vm1073 = vweird.f32 %v1067
  %vm1074 = vweird.f32 %v1068
  %vm1075 = vmor %vm1073, %vm1074
  %v1076 = vsel %vm1075, %v1068, %v1072
  %v1077 = vand.u32 2147483647, %v1067
  %vm1078 = vcmp.eq.f32.partialorder %v1077, 8.507059e+37
  %v1079 = vand.u32 %v1067, 2147483648
  %v1080 = vor.u32 1.1754944e-38, %v1079
  %v1081 = vsel %vm1078, %v1080, %v1076
  %v1082 = vmul.f32 1.0, %v1081
  %v1083 = vsub.f32 0.0, %v1022
  %v1084 = vmul.f32 %v1083, 1.442695
  %v1085 = vpow.pop %v1084
  %v1086 = vadd.f32 %v1085, 1.0
  %v1087 = vrcp.pop %v1086
  %v1088 = vmul.f32 %v1086, %v1087
  %v1089 = vsub.f32 1.0, %v1088
  %v1090 = vmul.f32 %v1087, %v1089
  %v1091 = vadd.f32 %v1087, %v1090
  %vm1092 = vweird.f32 %v1086
  %vm1093 = vweird.f32 %v1087
  %vm1094 = vmor %vm1092, %vm1093
  %v1095 = vsel %vm1094, %v1087, %v1091
  %v1096 = vand.u32 2147483647, %v1086
  %vm1097 = vcmp.eq.f32.partialorder %v1096, 8.507059e+37
  %v1098 = vand.u32 %v1086, 2147483648
  %v1099 = vor.u32 1.1754944e-38, %v1098
  %v1100 = vsel %vm1097, %v1099, %v1095
  %v1101 = vmul.f32 1.0, %v1100
  %v1102 = vtanh.pop %v1042
  %v1103 = vsub.f32 0.0, %v1062
  %v1104 = vmul.f32 %v1103, 1.442695
  %v1105 = vpow.pop %v1104
  %v1106 = vadd.f32 %v1105, 1.0
  %v1107 = vrcp.pop %v1106
  %v1108 = vmul.f32 %v1106, %v1107
  %v1109 = vsub.f32 1.0, %v1108
  %v1110 = vmul.f32 %v1107, %v1109
  %v1111 = vadd.f32 %v1107, %v1110
  %vm1112 = vweird.f32 %v1106
  %vm1113 = vweird.f32 %v1107
  %vm1114 = vmor %vm1112, %vm1113
  %v1115 = vsel %vm1114, %v1107, %v1111
  %v1116 = vand.u32 2147483647, %v1106
  %vm1117 = vcmp.eq.f32.partialorder %v1116, 8.507059e+37
  %v1118 = vand.u32 %v1106, 2147483648
  %v1119 = vor.u32 1.1754944e-38, %v1118
  %v1120 = vsel %vm1117, %v1119, %v1115
  %v1121 = vmul.f32 1.0, %v1120
  %v1122 = vmul.f32 %v1101, %v974
  %v1123 = vmul.f32 %v1082, %v1102
  %v1124 = vadd.f32 %v1122, %v1123
  %v1125 = vtanh.pop %v1124
  %v1126 = vmul.f32 %v1121, %v1125
  %s1127 = smul.u32 5, 4
  %s1128 = smul.addr %s1127, 8
  %s1129 = scalar_lea.vmem [#allocation2], %s1128
  %v1130 = vld [vmem:[%s1129] sm:$0xff]
  %v1131 = vld [vmem:[%s1129 + $0x8] sm:$0xff]
  %v1132 = vld [vmem:[%s1129 + $0x10] sm:$0xff]
  %v1133 = vld [vmem:[%s1129 + $0x18] sm:$0xff]
  %1134 = vmatpush.msra.mxu0 %v373
  %1135 = vmatpush.msra.mxu0 %v369
  %1136 = vmatpush.msra.mxu0 %v365
  %1137 = vmatpush.msra.mxu0 %v361
  %1138 = vmatpush.msra.mxu0 %v357
  %1139 = vmatpush.msra.mxu0 %v353
  %1140 = vmatpush.msra.mxu0 %v349
  %1141 = vmatpush.msra.mxu0 %v345
  %1142 = vmatpush.msra.mxu0 %v341
  %1143 = vmatpush.msra.mxu0 %v337
  %1144 = vmatpush.msra.mxu0 %v333
  %1145 = vmatpush.msra.mxu0 %v329
  %1146 = vmatpush.msra.mxu0 %v325
  %1147 = vmatpush.msra.mxu0 %v321
  %1148 = vmatpush.msra.mxu0 %v317
  %1149 = vmatpush.msra.mxu0 %v313
  %1150 = vmatmul.f32.gmra.mxu0 %v1126
  %v1151 = vpop.f32.mrf.mxu0
  %v1152 = vadd.f32 %v1130, %v1151
  %1153 = vdwg.mxu0
  %1154 = vmatpush.msra.mxu0 %v374
  %1155 = vmatpush.msra.mxu0 %v370
  %1156 = vmatpush.msra.mxu0 %v366
  %1157 = vmatpush.msra.mxu0 %v362
  %1158 = vmatpush.msra.mxu0 %v358
  %1159 = vmatpush.msra.mxu0 %v354
  %1160 = vmatpush.msra.mxu0 %v350
  %1161 = vmatpush.msra.mxu0 %v346
  %1162 = vmatpush.msra.mxu0 %v342
  %1163 = vmatpush.msra.mxu0 %v338
  %1164 = vmatpush.msra.mxu0 %v334
  %1165 = vmatpush.msra.mxu0 %v330
  %1166 = vmatpush.msra.mxu0 %v326
  %1167 = vmatpush.msra.mxu0 %v322
  %1168 = vmatpush.msra.mxu0 %v318
  %1169 = vmatpush.msra.mxu0 %v314
  %1170 = vmatmul.f32.gmra.mxu0 %v1126
  %v1171 = vpop.f32.mrf.mxu0
  %v1172 = vadd.f32 %v1131, %v1171
  %1173 = vdwg.mxu0
  %1174 = vmatpush.msra.mxu0 %v375
  %1175 = vmatpush.msra.mxu0 %v371
  %1176 = vmatpush.msra.mxu0 %v367
  %1177 = vmatpush.msra.mxu0 %v363
  %1178 = vmatpush.msra.mxu0 %v359
  %1179 = vmatpush.msra.mxu0 %v355
  %1180 = vmatpush.msra.mxu0 %v351
  %1181 = vmatpush.msra.mxu0 %v347
  %1182 = vmatpush.msra.mxu0 %v343
  %1183 = vmatpush.msra.mxu0 %v339
  %1184 = vmatpush.msra.mxu0 %v335
  %1185 = vmatpush.msra.mxu0 %v331
  %1186 = vmatpush.msra.mxu0 %v327
  %1187 = vmatpush.msra.mxu0 %v323
  %1188 = vmatpush.msra.mxu0 %v319
  %1189 = vmatpush.msra.mxu0 %v315
  %1190 = vmatmul.f32.gmra.mxu0 %v1126
  %v1191 = vpop.f32.mrf.mxu0
  %v1192 = vadd.f32 %v1132, %v1191
  %1193 = vdwg.mxu0
  %1194 = vmatpush.msra.mxu0 %v376
  %1195 = vmatpush.msra.mxu0 %v372
  %1196 = vmatpush.msra.mxu0 %v368
  %1197 = vmatpush.msra.mxu0 %v364
  %1198 = vmatpush.msra.mxu0 %v360
  %1199 = vmatpush.msra.mxu0 %v356
  %1200 = vmatpush.msra.mxu0 %v352
  %1201 = vmatpush.msra.mxu0 %v348
  %1202 = vmatpush.msra.mxu0 %v344
  %1203 = vmatpush.msra.mxu0 %v340
  %1204 = vmatpush.msra.mxu0 %v336
  %1205 = vmatpush.msra.mxu0 %v332
  %1206 = vmatpush.msra.mxu0 %v328
  %1207 = vmatpush.msra.mxu0 %v324
  %1208 = vmatpush.msra.mxu0 %v320
  %1209 = vmatpush.msra.mxu0 %v316
  %1210 = vmatmul.f32.gmra.mxu0 %v1126
  %v1211 = vpop.f32.mrf.mxu0
  %v1212 = vadd.f32 %v1133, %v1211
  %1213 = vdwg.mxu0
  %v1214 = vsub.f32 0.0, %v1152
  %v1215 = vmul.f32 %v1214, 1.442695
  %v1216 = vpow.pop %v1215
  %v1217 = vadd.f32 %v1216, 1.0
  %v1218 = vrcp.pop %v1217
  %v1219 = vmul.f32 %v1217, %v1218
  %v1220 = vsub.f32 1.0, %v1219
  %v1221 = vmul.f32 %v1218, %v1220
  %v1222 = vadd.f32 %v1218, %v1221
  %vm1223 = vweird.f32 %v1217
  %vm1224 = vweird.f32 %v1218
  %vm1225 = vmor %vm1223, %vm1224
  %v1226 = vsel %vm1225, %v1218, %v1222
  %v1227 = vand.u32 2147483647, %v1217
  %vm1228 = vcmp.eq.f32.partialorder %v1227, 8.507059e+37
  %v1229 = vand.u32 %v1217, 2147483648
  %v1230 = vor.u32 1.1754944e-38, %v1229
  %v1231 = vsel %vm1228, %v1230, %v1226
  %v1232 = vmul.f32 1.0, %v1231
  %v1233 = vsub.f32 0.0, %v1172
  %v1234 = vmul.f32 %v1233, 1.442695
  %v1235 = vpow.pop %v1234
  %v1236 = vadd.f32 %v1235, 1.0
  %v1237 = vrcp.pop %v1236
  %v1238 = vmul.f32 %v1236, %v1237
  %v1239 = vsub.f32 1.0, %v1238
  %v1240 = vmul.f32 %v1237, %v1239
  %v1241 = vadd.f32 %v1237, %v1240
  %vm1242 = vweird.f32 %v1236
  %vm1243 = vweird.f32 %v1237
  %vm1244 = vmor %vm1242, %vm1243
  %v1245 = vsel %vm1244, %v1237, %v1241
  %v1246 = vand.u32 2147483647, %v1236
  %vm1247 = vcmp.eq.f32.partialorder %v1246, 8.507059e+37
  %v1248 = vand.u32 %v1236, 2147483648
  %v1249 = vor.u32 1.1754944e-38, %v1248
  %v1250 = vsel %vm1247, %v1249, %v1245
  %v1251 = vmul.f32 1.0, %v1250
  %v1252 = vtanh.pop %v1192
  %v1253 = vsub.f32 0.0, %v1212
  %v1254 = vmul.f32 %v1253, 1.442695
  %v1255 = vpow.pop %v1254
  %v1256 = vadd.f32 %v1255, 1.0
  %v1257 = vrcp.pop %v1256
  %v1258 = vmul.f32 %v1256, %v1257
  %v1259 = vsub.f32 1.0, %v1258
  %v1260 = vmul.f32 %v1257, %v1259
  %v1261 = vadd.f32 %v1257, %v1260
  %vm1262 = vweird.f32 %v1256
  %vm1263 = vweird.f32 %v1257
  %vm1264 = vmor %vm1262, %vm1263
  %v1265 = vsel %vm1264, %v1257, %v1261
  %v1266 = vand.u32 2147483647, %v1256
  %vm1267 = vcmp.eq.f32.partialorder %v1266, 8.507059e+37
  %v1268 = vand.u32 %v1256, 2147483648
  %v1269 = vor.u32 1.1754944e-38, %v1268
  %v1270 = vsel %vm1267, %v1269, %v1265
  %v1271 = vmul.f32 1.0, %v1270
  %v1272 = vmul.f32 %v1251, %v1124
  %v1273 = vmul.f32 %v1232, %v1252
  %v1274 = vadd.f32 %v1272, %v1273
  %v1275 = vtanh.pop %v1274
  %v1276 = vmul.f32 %v1271, %v1275
  %s1277 = smul.u32 6, 4
  %s1278 = smul.addr %s1277, 8
  %s1279 = scalar_lea.vmem [#allocation2], %s1278
  %v1280 = vld [vmem:[%s1279] sm:$0xff]
  %v1281 = vld [vmem:[%s1279 + $0x8] sm:$0xff]
  %v1282 = vld [vmem:[%s1279 + $0x10] sm:$0xff]
  %v1283 = vld [vmem:[%s1279 + $0x18] sm:$0xff]
  %1284 = vmatpush.msra.mxu0 %v373
  %1285 = vmatpush.msra.mxu0 %v369
  %1286 = vmatpush.msra.mxu0 %v365
  %1287 = vmatpush.msra.mxu0 %v361
  %1288 = vmatpush.msra.mxu0 %v357
  %1289 = vmatpush.msra.mxu0 %v353
  %1290 = vmatpush.msra.mxu0 %v349
  %1291 = vmatpush.msra.mxu0 %v345
  %1292 = vmatpush.msra.mxu0 %v341
  %1293 = vmatpush.msra.mxu0 %v337
  %1294 = vmatpush.msra.mxu0 %v333
  %1295 = vmatpush.msra.mxu0 %v329
  %1296 = vmatpush.msra.mxu0 %v325
  %1297 = vmatpush.msra.mxu0 %v321
  %1298 = vmatpush.msra.mxu0 %v317
  %1299 = vmatpush.msra.mxu0 %v313
  %1300 = vmatmul.f32.gmra.mxu0 %v1276
  %v1301 = vpop.f32.mrf.mxu0
  %v1302 = vadd.f32 %v1280, %v1301
  %1303 = vdwg.mxu0
  %1304 = vmatpush.msra.mxu0 %v374
  %1305 = vmatpush.msra.mxu0 %v370
  %1306 = vmatpush.msra.mxu0 %v366
  %1307 = vmatpush.msra.mxu0 %v362
  %1308 = vmatpush.msra.mxu0 %v358
  %1309 = vmatpush.msra.mxu0 %v354
  %1310 = vmatpush.msra.mxu0 %v350
  %1311 = vmatpush.msra.mxu0 %v346
  %1312 = vmatpush.msra.mxu0 %v342
  %1313 = vmatpush.msra.mxu0 %v338
  %1314 = vmatpush.msra.mxu0 %v334
  %1315 = vmatpush.msra.mxu0 %v330
  %1316 = vmatpush.msra.mxu0 %v326
  %1317 = vmatpush.msra.mxu0 %v322
  %1318 = vmatpush.msra.mxu0 %v318
  %1319 = vmatpush.msra.mxu0 %v314
  %1320 = vmatmul.f32.gmra.mxu0 %v1276
  %v1321 = vpop.f32.mrf.mxu0
  %v1322 = vadd.f32 %v1281, %v1321
  %1323 = vdwg.mxu0
  %1324 = vmatpush.msra.mxu0 %v375
  %1325 = vmatpush.msra.mxu0 %v371
  %1326 = vmatpush.msra.mxu0 %v367
  %1327 = vmatpush.msra.mxu0 %v363
  %1328 = vmatpush.msra.mxu0 %v359
  %1329 = vmatpush.msra.mxu0 %v355
  %1330 = vmatpush.msra.mxu0 %v351
  %1331 = vmatpush.msra.mxu0 %v347
  %1332 = vmatpush.msra.mxu0 %v343
  %1333 = vmatpush.msra.mxu0 %v339
  %1334 = vmatpush.msra.mxu0 %v335
  %1335 = vmatpush.msra.mxu0 %v331
  %1336 = vmatpush.msra.mxu0 %v327
  %1337 = vmatpush.msra.mxu0 %v323
  %1338 = vmatpush.msra.mxu0 %v319
  %1339 = vmatpush.msra.mxu0 %v315
  %1340 = vmatmul.f32.gmra.mxu0 %v1276
  %v1341 = vpop.f32.mrf.mxu0
  %v1342 = vadd.f32 %v1282, %v1341
  %1343 = vdwg.mxu0
  %1344 = vmatpush.msra.mxu0 %v376
  %1345 = vmatpush.msra.mxu0 %v372
  %1346 = vmatpush.msra.mxu0 %v368
  %1347 = vmatpush.msra.mxu0 %v364
  %1348 = vmatpush.msra.mxu0 %v360
  %1349 = vmatpush.msra.mxu0 %v356
  %1350 = vmatpush.msra.mxu0 %v352
  %1351 = vmatpush.msra.mxu0 %v348
  %1352 = vmatpush.msra.mxu0 %v344
  %1353 = vmatpush.msra.mxu0 %v340
  %1354 = vmatpush.msra.mxu0 %v336
  %1355 = vmatpush.msra.mxu0 %v332
  %1356 = vmatpush.msra.mxu0 %v328
  %1357 = vmatpush.msra.mxu0 %v324
  %1358 = vmatpush.msra.mxu0 %v320
  %1359 = vmatpush.msra.mxu0 %v316
  %1360 = vmatmul.f32.gmra.mxu0 %v1276
  %v1361 = vpop.f32.mrf.mxu0
  %v1362 = vadd.f32 %v1283, %v1361
  %1363 = vdwg.mxu0
  %v1364 = vsub.f32 0.0, %v1302
  %v1365 = vmul.f32 %v1364, 1.442695
  %v1366 = vpow.pop %v1365
  %v1367 = vadd.f32 %v1366, 1.0
  %v1368 = vrcp.pop %v1367
  %v1369 = vmul.f32 %v1367, %v1368
  %v1370 = vsub.f32 1.0, %v1369
  %v1371 = vmul.f32 %v1368, %v1370
  %v1372 = vadd.f32 %v1368, %v1371
  %vm1373 = vweird.f32 %v1367
  %vm1374 = vweird.f32 %v1368
  %vm1375 = vmor %vm1373, %vm1374
  %v1376 = vsel %vm1375, %v1368, %v1372
  %v1377 = vand.u32 2147483647, %v1367
  %vm1378 = vcmp.eq.f32.partialorder %v1377, 8.507059e+37
  %v1379 = vand.u32 %v1367, 2147483648
  %v1380 = vor.u32 1.1754944e-38, %v1379
  %v1381 = vsel %vm1378, %v1380, %v1376
  %v1382 = vmul.f32 1.0, %v1381
  %v1383 = vsub.f32 0.0, %v1322
  %v1384 = vmul.f32 %v1383, 1.442695
  %v1385 = vpow.pop %v1384
  %v1386 = vadd.f32 %v1385, 1.0
  %v1387 = vrcp.pop %v1386
  %v1388 = vmul.f32 %v1386, %v1387
  %v1389 = vsub.f32 1.0, %v1388
  %v1390 = vmul.f32 %v1387, %v1389
  %v1391 = vadd.f32 %v1387, %v1390
  %vm1392 = vweird.f32 %v1386
  %vm1393 = vweird.f32 %v1387
  %vm1394 = vmor %vm1392, %vm1393
  %v1395 = vsel %vm1394, %v1387, %v1391
  %v1396 = vand.u32 2147483647, %v1386
  %vm1397 = vcmp.eq.f32.partialorder %v1396, 8.507059e+37
  %v1398 = vand.u32 %v1386, 2147483648
  %v1399 = vor.u32 1.1754944e-38, %v1398
  %v1400 = vsel %vm1397, %v1399, %v1395
  %v1401 = vmul.f32 1.0, %v1400
  %v1402 = vtanh.pop %v1342
  %v1403 = vsub.f32 0.0, %v1362
  %v1404 = vmul.f32 %v1403, 1.442695
  %v1405 = vpow.pop %v1404
  %v1406 = vadd.f32 %v1405, 1.0
  %v1407 = vrcp.pop %v1406
  %v1408 = vmul.f32 %v1406, %v1407
  %v1409 = vsub.f32 1.0, %v1408
  %v1410 = vmul.f32 %v1407, %v1409
  %v1411 = vadd.f32 %v1407, %v1410
  %vm1412 = vweird.f32 %v1406
  %vm1413 = vweird.f32 %v1407
  %vm1414 = vmor %vm1412, %vm1413
  %v1415 = vsel %vm1414, %v1407, %v1411
  %v1416 = vand.u32 2147483647, %v1406
  %vm1417 = vcmp.eq.f32.partialorder %v1416, 8.507059e+37
  %v1418 = vand.u32 %v1406, 2147483648
  %v1419 = vor.u32 1.1754944e-38, %v1418
  %v1420 = vsel %vm1417, %v1419, %v1415
  %v1421 = vmul.f32 1.0, %v1420
  %v1422 = vmul.f32 %v1401, %v1274
  %v1423 = vmul.f32 %v1382, %v1402
  %v1424 = vadd.f32 %v1422, %v1423
  %v1425 = vtanh.pop %v1424
  %v1426 = vmul.f32 %v1421, %v1425
  %s1427 = smul.u32 7, 4
  %s1428 = smul.addr %s1427, 8
  %s1429 = scalar_lea.vmem [#allocation2], %s1428
  %v1430 = vld [vmem:[%s1429] sm:$0xff]
  %v1431 = vld [vmem:[%s1429 + $0x8] sm:$0xff]
  %v1432 = vld [vmem:[%s1429 + $0x10] sm:$0xff]
  %v1433 = vld [vmem:[%s1429 + $0x18] sm:$0xff]
  %1434 = vmatpush.msra.mxu0 %v373
  %1435 = vmatpush.msra.mxu0 %v369
  %1436 = vmatpush.msra.mxu0 %v365
  %1437 = vmatpush.msra.mxu0 %v361
  %1438 = vmatpush.msra.mxu0 %v357
  %1439 = vmatpush.msra.mxu0 %v353
  %1440 = vmatpush.msra.mxu0 %v349
  %1441 = vmatpush.msra.mxu0 %v345
  %1442 = vmatpush.msra.mxu0 %v341
  %1443 = vmatpush.msra.mxu0 %v337
  %1444 = vmatpush.msra.mxu0 %v333
  %1445 = vmatpush.msra.mxu0 %v329
  %1446 = vmatpush.msra.mxu0 %v325
  %1447 = vmatpush.msra.mxu0 %v321
  %1448 = vmatpush.msra.mxu0 %v317
  %1449 = vmatpush.msra.mxu0 %v313
  %1450 = vmatmul.f32.gmra.mxu0 %v1426
  %v1451 = vpop.f32.mrf.mxu0
  %v1452 = vadd.f32 %v1430, %v1451
  %1453 = vdwg.mxu0
  %1454 = vmatpush.msra.mxu0 %v374
  %1455 = vmatpush.msra.mxu0 %v370
  %1456 = vmatpush.msra.mxu0 %v366
  %1457 = vmatpush.msra.mxu0 %v362
  %1458 = vmatpush.msra.mxu0 %v358
  %1459 = vmatpush.msra.mxu0 %v354
  %1460 = vmatpush.msra.mxu0 %v350
  %1461 = vmatpush.msra.mxu0 %v346
  %1462 = vmatpush.msra.mxu0 %v342
  %1463 = vmatpush.msra.mxu0 %v338
  %1464 = vmatpush.msra.mxu0 %v334
  %1465 = vmatpush.msra.mxu0 %v330
  %1466 = vmatpush.msra.mxu0 %v326
  %1467 = vmatpush.msra.mxu0 %v322
  %1468 = vmatpush.msra.mxu0 %v318
  %1469 = vmatpush.msra.mxu0 %v314
  %1470 = vmatmul.f32.gmra.mxu0 %v1426
  %v1471 = vpop.f32.mrf.mxu0
  %v1472 = vadd.f32 %v1431, %v1471
  %1473 = vdwg.mxu0
  %1474 = vmatpush.msra.mxu0 %v375
  %1475 = vmatpush.msra.mxu0 %v371
  %1476 = vmatpush.msra.mxu0 %v367
  %1477 = vmatpush.msra.mxu0 %v363
  %1478 = vmatpush.msra.mxu0 %v359
  %1479 = vmatpush.msra.mxu0 %v355
  %1480 = vmatpush.msra.mxu0 %v351
  %1481 = vmatpush.msra.mxu0 %v347
  %1482 = vmatpush.msra.mxu0 %v343
  %1483 = vmatpush.msra.mxu0 %v339
  %1484 = vmatpush.msra.mxu0 %v335
  %1485 = vmatpush.msra.mxu0 %v331
  %1486 = vmatpush.msra.mxu0 %v327
  %1487 = vmatpush.msra.mxu0 %v323
  %1488 = vmatpush.msra.mxu0 %v319
  %1489 = vmatpush.msra.mxu0 %v315
  %1490 = vmatmul.f32.gmra.mxu0 %v1426
  %v1491 = vpop.f32.mrf.mxu0
  %v1492 = vadd.f32 %v1432, %v1491
  %1493 = vdwg.mxu0
  %1494 = vmatpush.msra.mxu0 %v376
  %1495 = vmatpush.msra.mxu0 %v372
  %1496 = vmatpush.msra.mxu0 %v368
  %1497 = vmatpush.msra.mxu0 %v364
  %1498 = vmatpush.msra.mxu0 %v360
  %1499 = vmatpush.msra.mxu0 %v356
  %1500 = vmatpush.msra.mxu0 %v352
  %1501 = vmatpush.msra.mxu0 %v348
  %1502 = vmatpush.msra.mxu0 %v344
  %1503 = vmatpush.msra.mxu0 %v340
  %1504 = vmatpush.msra.mxu0 %v336
  %1505 = vmatpush.msra.mxu0 %v332
  %1506 = vmatpush.msra.mxu0 %v328
  %1507 = vmatpush.msra.mxu0 %v324
  %1508 = vmatpush.msra.mxu0 %v320
  %1509 = vmatpush.msra.mxu0 %v316
  %1510 = vmatmul.f32.gmra.mxu0 %v1426
  %v1511 = vpop.f32.mrf.mxu0
  %v1512 = vadd.f32 %v1433, %v1511
  %1513 = vdwg.mxu0
  %v1514 = vsub.f32 0.0, %v1452
  %v1515 = vmul.f32 %v1514, 1.442695
  %v1516 = vpow.pop %v1515
  %v1517 = vadd.f32 %v1516, 1.0
  %v1518 = vrcp.pop %v1517
  %v1519 = vmul.f32 %v1517, %v1518
  %v1520 = vsub.f32 1.0, %v1519
  %v1521 = vmul.f32 %v1518, %v1520
  %v1522 = vadd.f32 %v1518, %v1521
  %vm1523 = vweird.f32 %v1517
  %vm1524 = vweird.f32 %v1518
  %vm1525 = vmor %vm1523, %vm1524
  %v1526 = vsel %vm1525, %v1518, %v1522
  %v1527 = vand.u32 2147483647, %v1517
  %vm1528 = vcmp.eq.f32.partialorder %v1527, 8.507059e+37
  %v1529 = vand.u32 %v1517, 2147483648
  %v1530 = vor.u32 1.1754944e-38, %v1529
  %v1531 = vsel %vm1528, %v1530, %v1526
  %v1532 = vmul.f32 1.0, %v1531
  %v1533 = vsub.f32 0.0, %v1472
  %v1534 = vmul.f32 %v1533, 1.442695
  %v1535 = vpow.pop %v1534
  %v1536 = vadd.f32 %v1535, 1.0
  %v1537 = vrcp.pop %v1536
  %v1538 = vmul.f32 %v1536, %v1537
  %v1539 = vsub.f32 1.0, %v1538
  %v1540 = vmul.f32 %v1537, %v1539
  %v1541 = vadd.f32 %v1537, %v1540
  %vm1542 = vweird.f32 %v1536
  %vm1543 = vweird.f32 %v1537
  %vm1544 = vmor %vm1542, %vm1543
  %v1545 = vsel %vm1544, %v1537, %v1541
  %v1546 = vand.u32 2147483647, %v1536
  %vm1547 = vcmp.eq.f32.partialorder %v1546, 8.507059e+37
  %v1548 = vand.u32 %v1536, 2147483648
  %v1549 = vor.u32 1.1754944e-38, %v1548
  %v1550 = vsel %vm1547, %v1549, %v1545
  %v1551 = vmul.f32 1.0, %v1550
  %v1552 = vtanh.pop %v1492
  %v1553 = vsub.f32 0.0, %v1512
  %v1554 = vmul.f32 %v1553, 1.442695
  %v1555 = vpow.pop %v1554
  %v1556 = vadd.f32 %v1555, 1.0
  %v1557 = vrcp.pop %v1556
  %v1558 = vmul.f32 %v1556, %v1557
  %v1559 = vsub.f32 1.0, %v1558
  %v1560 = vmul.f32 %v1557, %v1559
  %v1561 = vadd.f32 %v1557, %v1560
  %vm1562 = vweird.f32 %v1556
  %vm1563 = vweird.f32 %v1557
  %vm1564 = vmor %vm1562, %vm1563
  %v1565 = vsel %vm1564, %v1557, %v1561
  %v1566 = vand.u32 2147483647, %v1556
  %vm1567 = vcmp.eq.f32.partialorder %v1566, 8.507059e+37
  %v1568 = vand.u32 %v1556, 2147483648
  %v1569 = vor.u32 1.1754944e-38, %v1568
  %v1570 = vsel %vm1567, %v1569, %v1565
  %v1571 = vmul.f32 1.0, %v1570
  %v1572 = vmul.f32 %v1551, %v1424
  %v1573 = vmul.f32 %v1532, %v1552
  %v1574 = vadd.f32 %v1572, %v1573
  %v1575 = vtanh.pop %v1574
  %v1576 = vmul.f32 %v1571, %v1575
  %v1577 = vld [vmem:[%s5] sm:$0xff]
  %v1578 = vld [vmem:[%s5 + $0x8] sm:$0xff]
  %v1579 = vld [vmem:[%s5 + $0x10] sm:$0xff]
  %v1580 = vld [vmem:[%s5 + $0x18] sm:$0xff]
  %v1581 = vld [vmem:[%s5 + $0x20] sm:$0xff]
  %v1582 = vld [vmem:[%s5 + $0x28] sm:$0xff]
  %v1583 = vld [vmem:[%s5 + $0x30] sm:$0xff]
  %v1584 = vld [vmem:[%s5 + $0x38] sm:$0xff]
  %v1585 = vld [vmem:[%s5 + $0x40] sm:$0xff]
  %v1586 = vld [vmem:[%s5 + $0x48] sm:$0xff]
  %v1587 = vld [vmem:[%s5 + $0x50] sm:$0xff]
  %v1588 = vld [vmem:[%s5 + $0x58] sm:$0xff]
  %v1589 = vld [vmem:[%s5 + $0x60] sm:$0xff]
  %v1590 = vld [vmem:[%s5 + $0x68] sm:$0xff]
  %v1591 = vld [vmem:[%s5 + $0x70] sm:$0xff]
  %v1592 = vld [vmem:[%s5 + $0x78] sm:$0xff]
  %v1593 = vld [vmem:[%s1] sm:$0xff]
  %v1594 = vld [vmem:[%s6] sm:$0xff]
  %v1595 = vld [vmem:[%s6 + $0x8] sm:$0xff]
  %v1596 = vld [vmem:[%s6 + $0x10] sm:$0xff]
  %v1597 = vld [vmem:[%s6 + $0x18] sm:$0xff]
  %vm1598 = vcmask 261120
  %v1600 = vsel %vm1598, %v1593, 0
  %1602 = vmatpush.msra.mxu0 0.0
  %1603 = vmatpush.msra.mxu0 0.0
  %1604 = vmatpush.msra.mxu0 0.0
  %1605 = vmatpush.msra.mxu0 0.0
  %1606 = vmatpush.msra.mxu0 0.0
  %1607 = vmatpush.msra.mxu0 0.0
  %1608 = vmatpush.msra.mxu0 0.0
  %1609 = vmatpush.msra.mxu0 0.0
  %1610 = vmatpush.msra.mxu0 0.0
  %1611 = vmatpush.msra.mxu0 0.0
  %1612 = vmatpush.msra.mxu0 0.0
  %1613 = vmatpush.msra.mxu0 0.0
  %1614 = vmatpush.msra.mxu0 %v1597
  %1615 = vmatpush.msra.mxu0 %v1596
  %1616 = vmatpush.msra.mxu0 %v1595
  %1617 = vmatpush.msra.mxu0 %v1594
  %1618 = vmatmul.f32.gmra.mxu0 %v1600
  %v1619 = vpop.f32.mrf.mxu0
  %v1620 = vadd.f32 0.0, %v1619
  %1621 = vdwg.mxu0
  %1622 = vmatpush.msra.mxu0 %v1592
  %1623 = vmatpush.msra.mxu0 %v1591
  %1624 = vmatpush.msra.mxu0 %v1590
  %1625 = vmatpush.msra.mxu0 %v1589
  %1626 = vmatpush.msra.mxu0 %v1588
  %1627 = vmatpush.msra.mxu0 %v1587
  %1628 = vmatpush.msra.mxu0 %v1586
  %1629 = vmatpush.msra.mxu0 %v1585
  %1630 = vmatpush.msra.mxu0 %v1584
  %1631 = vmatpush.msra.mxu0 %v1583
  %1632 = vmatpush.msra.mxu0 %v1582
  %1633 = vmatpush.msra.mxu0 %v1581
  %1634 = vmatpush.msra.mxu0 %v1580
  %1635 = vmatpush.msra.mxu0 %v1579
  %1636 = vmatpush.msra.mxu0 %v1578
  %1637 = vmatpush.msra.mxu0 %v1577
  %1638 = vmatmul.f32.gmra.mxu0 %v1576
  %v1639 = vpop.f32.mrf.mxu0
  %v1640 = vadd.f32 %v1620, %v1639
  %1641 = vdwg.mxu0
  %v1642 = vld [vmem:[%s7] sm:$0x1]
  %v1644 = vperm.slane %v1642, 0
  %v1646 = vadd.f32 %v1640, %v1644
  %v1647 = vmax.f32 %v1646, 0.0
  %v1648 = vld [vmem:[%s8] sm:$0xff]
  %v1649 = vld [vmem:[%s8 + $0x8] sm:$0xff]
  %v1650 = vld [vmem:[%s8 + $0x10] sm:$0xff]
  %v1651 = vld [vmem:[%s8 + $0x18] sm:$0xff]
  %v1652 = vld [vmem:[%s9] sm:$0x1]
  %v1654 = vperm.slane %v1652, 0
  %v1657 = vsel %vm1598, %v1647, 0
  %1659 = vmatpush.msra.mxu0 0.0
  %1660 = vmatpush.msra.mxu0 0.0
  %1661 = vmatpush.msra.mxu0 0.0
  %1662 = vmatpush.msra.mxu0 0.0
  %1663 = vmatpush.msra.mxu0 0.0
  %1664 = vmatpush.msra.mxu0 0.0
  %1665 = vmatpush.msra.mxu0 0.0
  %1666 = vmatpush.msra.mxu0 0.0
  %1667 = vmatpush.msra.mxu0 0.0
  %1668 = vmatpush.msra.mxu0 0.0
  %1669 = vmatpush.msra.mxu0 0.0
  %1670 = vmatpush.msra.mxu0 0.0
  %1671 = vmatpush.msra.mxu0 %v1651
  %1672 = vmatpush.msra.mxu0 %v1650
  %1673 = vmatpush.msra.mxu0 %v1649
  %1674 = vmatpush.msra.mxu0 %v1648
  %1675 = vmatmul.f32.gmra.mxu0 %v1657
  %v1676 = vpop.f32.mrf.mxu0
  %v1677 = vadd.f32 %v1654, %v1676
  %1678 = vdwg.mxu0
  %1679 = vst [vmem:[%s10] sm:$0xff] %v1677
  // Predicated region
  $region42: #{binary_model_forward.1} parent=0 // pred_check
    _
  $region43: #{binary_model_forward.1} parent=0 // pred_check_branch
    %1681 = sbr.rel (0) target = $region45
  $region44: #{binary_model_forward.1} parent=0 // pred_region
    _
  $region45: #{binary_model_forward.1} parent=0 // pred_fallthru
    _
  // Predicated region
  $region46: #{binary_model_forward.1} parent=0 // pred_check
    _
  $region47: #{binary_model_forward.1} parent=0 // pred_check_branch
    %1683 = sbr.rel (0) target = $region49
  $region48: #{binary_model_forward.1} parent=0 // pred_region
    _
  $region49: #{binary_model_forward.1} parent=0 // pred_fallthru
    _

</llo_original>
